<compile_context>
chip_gen: v5e
topology: v5e:2x2
jax: 0.10.0
libtpu: 0.0.40
codegen_flags: <defaults>
</compile_context>

<pallas_src>
import jax
import jax.numpy as jnp
import numpy as np
from jax import lax
from jax.experimental import pallas as pl
from jax.experimental.pallas import tpu as pltpu

KH = KW = 3  # conv2 kernel size (stride=1, dilation=1, pad=1)


def _round_up(x, m):
    return (x + m - 1) // m * m


def _resblock_kernel(x_ref, w1_ref, s1_ref, b1_ref, w2_ref, s2_ref, b2_ref,
                     o_ref, ypad_ref):
    """Fused ResBlock_2d forward for one batch element (channels pre-padded).

    x_ref   : (H, W, C)            input tile (NHWC, C padded to 128)
    w1_ref  : (C, Cmid)            1x1 conv weight (in, out), zero-padded
    s1_ref  : (1, Cmid)            folded BN1 scale
    b1_ref  : (1, Cmid)            folded BN1 bias (conv bias + BN)
    w2_ref  : (KH, KW, Cmid, C)    3x3 conv weight (kh, kw, in, out), zero-padded
    s2_ref  : (1, C)               folded BN2 scale
    b2_ref  : (1, C)               folded BN2 bias
    o_ref   : (H, W, C)            output tile
    ypad_ref: (H+2, Wp, Cmid)      VMEM scratch, zero-padded conv1 activations
                                   (Wp = round_up(W+2, 8))
    """
    H, W, C = x_ref.shape
    Cmid = w1_ref.shape[1]
    Wp = ypad_ref.shape[1]

    # Re-zero only the halo border that conv2 reads but conv1 does not write.
    # Done every grid step (not gated on program_id == 0) so the kernel stays
    # correct if the "parallel" batch axis is split across TensorCores, each of
    # which gets its own (uninitialized) scratch buffer.
    ypad_ref[0:1, :, :] = jnp.zeros((1, Wp, Cmid), jnp.float32)
    ypad_ref[H + 1:H + 2, :, :] = jnp.zeros((1, Wp, Cmid), jnp.float32)
    ypad_ref[1:H + 1, 0:1, :] = jnp.zeros((H, 1, Cmid), jnp.float32)
    ypad_ref[1:H + 1, W + 1:W + 2, :] = jnp.zeros((H, 1, Cmid), jnp.float32)

    # ---- conv1 (1x1) + BN + ReLU : one whole-tile matmul on the MXU ----
    x_flat = x_ref[...].reshape(H * W, C)                          # (H*W, C)
    z = jnp.dot(x_flat, w1_ref[...], preferred_element_type=jnp.float32)
    y1 = jnp.maximum(z * s1_ref[...] + b1_ref[...], 0.0)           # (H*W, Cmid)
    ypad_ref[1:H + 1, 1:W + 1, :] = y1.reshape(H, W, Cmid)

    # ---- conv2 (3x3, pad=1) + BN + ReLU + residual add ----
    # Nine large (H*W, Cmid) @ (Cmid, C) matmuls, accumulated in f32.
    acc = jnp.zeros((H * W, C), jnp.float32)
    for kh in range(KH):
        for kw in range(KW):
            win = ypad_ref[kh:kh + H, kw:kw + W, :].reshape(H * W, Cmid)
            acc = acc + jnp.dot(win, w2_ref[kh, kw],
                                preferred_element_type=jnp.float32)
    y2 = jnp.maximum(acc * s2_ref[...] + b2_ref[...], 0.0)         # (H*W, C)

    # Single lane-dense slab store of the residual sum.
    o_ref[...] = (x_flat + y2).reshape(H, W, C)


def resblock_2d_forward(x_nchw, params):
    """x_nchw: (N, C, H, W) float32 -> (N, C, H, W) float32."""
    w1, s1, b1, w2, s2, b2 = params
    N, C, H, W = x_nchw.shape
    Cmid = w1.shape[1]

    # Lane-dense channel padding (zero-filled so padded lanes stay exactly 0
    # through conv/BN/ReLU/residual and can be sliced off at the end).
    Cp = _round_up(C, 128)
    Cmp = _round_up(Cmid, 128)
    Wp = _round_up(W + 2, 8)

    x = jnp.transpose(x_nchw, (0, 2, 3, 1)).astype(jnp.float32)    # NCHW -> NHWC
    x = jnp.pad(x, ((0, 0), (0, 0), (0, 0), (0, Cp - C)))

    w1p = jnp.pad(w1.astype(jnp.float32), ((0, Cp - C), (0, Cmp - Cmid)))
    s1p = jnp.pad(s1.astype(jnp.float32), (0, Cmp - Cmid)).reshape(1, Cmp)
    b1p = jnp.pad(b1.astype(jnp.float32), (0, Cmp - Cmid)).reshape(1, Cmp)
    w2p = jnp.pad(w2.astype(jnp.float32),
                  ((0, 0), (0, 0), (0, Cmp - Cmid), (0, Cp - C)))
    s2p = jnp.pad(s2.astype(jnp.float32), (0, Cp - C)).reshape(1, Cp)
    b2p = jnp.pad(b2.astype(jnp.float32), (0, Cp - C)).reshape(1, Cp)

    out = pl.pallas_call(
        _resblock_kernel,
        out_shape=jax.ShapeDtypeStruct((N, H, W, Cp), jnp.float32),
        grid=(N,),
        in_specs=[
            pl.BlockSpec((None, H, W, Cp), lambda n: (n, 0, 0, 0)),   # x (batch squeezed)
            pl.BlockSpec((Cp, Cmp), lambda n: (0, 0)),                # w1
            pl.BlockSpec((1, Cmp), lambda n: (0, 0)),                 # s1
            pl.BlockSpec((1, Cmp), lambda n: (0, 0)),                 # b1
            pl.BlockSpec((KH, KW, Cmp, Cp), lambda n: (0, 0, 0, 0)),  # w2
            pl.BlockSpec((1, Cp), lambda n: (0, 0)),                  # s2
            pl.BlockSpec((1, Cp), lambda n: (0, 0)),                  # b2
        ],
        out_specs=pl.BlockSpec((None, H, W, Cp), lambda n: (n, 0, 0, 0)),
        scratch_shapes=[pltpu.VMEM((H + 2, Wp, Cmp), jnp.float32)],
        compiler_params=pltpu.CompilerParams(
            dimension_semantics=("parallel",)),
    )(x, w1p, s1p, b1p, w2p, s2p, b2p)

    out = out[..., :C]                                             # drop padded lanes
    return jnp.transpose(out, (0, 3, 1, 2))                        # NHWC -> NCHW


def init_params(key, C):
    """Deterministic synthetic parameters (shapes follow the PyTorch module)."""
    Cmid = C // 2
    eps = 1e-5  # BatchNorm2d default
    ks = jax.random.split(key, 12)

    # conv1: torch weight (Cmid, C, 1, 1) -> kernel layout (C, Cmid)
    w1_t = jax.random.normal(ks[0], (Cmid, C), dtype=jnp.float32) / np.sqrt(C)
    w1 = jnp.transpose(w1_t, (1, 0))
    cb1 = 0.1 * jax.random.normal(ks[1], (Cmid,), dtype=jnp.float32)
    g1 = 1.0 + 0.1 * jax.random.normal(ks[2], (Cmid,), dtype=jnp.float32)
    beta1 = 0.1 * jax.random.normal(ks[3], (Cmid,), dtype=jnp.float32)
    mu1 = 0.05 * jax.random.normal(ks[4], (Cmid,), dtype=jnp.float32)
    var1 = jax.random.uniform(ks[5], (Cmid,), minval=0.5, maxval=1.5,
                              dtype=jnp.float32)
    s1 = g1 / jnp.sqrt(var1 + eps)
    b1 = (cb1 - mu1) * s1 + beta1

    # conv2: torch weight (C, Cmid, 3, 3) -> kernel layout (3, 3, Cmid, C)
    w2_t = jax.random.normal(ks[6], (C, Cmid, KH, KW),
                             dtype=jnp.float32) / np.sqrt(Cmid * KH * KW)
    w2 = jnp.transpose(w2_t, (2, 3, 1, 0))
    cb2 = 0.1 * jax.random.normal(ks[7], (C,), dtype=jnp.float32)
    g2 = 1.0 + 0.1 * jax.random.normal(ks[8], (C,), dtype=jnp.float32)
    beta2 = 0.1 * jax.random.normal(ks[9], (C,), dtype=jnp.float32)
    mu2 = 0.05 * jax.random.normal(ks[10], (C,), dtype=jnp.float32)
    var2 = jax.random.uniform(ks[11], (C,), minval=0.5, maxval=1.5,
                              dtype=jnp.float32)
    s2 = g2 / jnp.sqrt(var2 + eps)
    b2 = (cb2 - mu2) * s2 + beta2

    return (w1, s1, b1, w2, s2, b2)


def reference_forward(x_nchw, params):
    """Plain-JAX reference mirroring the PyTorch forward (inference mode)."""
    w1, s1, b1, w2, s2, b2 = params
    x = jnp.transpose(x_nchw, (0, 2, 3, 1)).astype(jnp.float32)    # NHWC
    y1 = jnp.maximum(jnp.einsum('nhwc,cd->nhwd', x, w1) * s1 + b1, 0.0)
    y2 = lax.conv_general_dilated(
        y1, w2, window_strides=(1, 1), padding=((1, 1), (1, 1)),
        dimension_numbers=('NHWC', 'HWIO', 'NHWC'))
    y2 = jnp.maximum(y2 * s2 + b2, 0.0)
    out = x + y2
    return jnp.transpose(out, (0, 3, 1, 2))


if __name__ == "__main__":
    key = jax.random.PRNGKey(0)
    kx, kp = jax.random.split(key)

    N, C, H, W = 2, 4, 16, 16            # small shapes: batch=2, channels=4, spatial=16
    x = jax.random.normal(kx, (N, C, H, W), dtype=jnp.float32)
    params = init_params(kp, C)

    out = jax.block_until_ready(resblock_2d_forward(x, params))
    ref = jax.block_until_ready(reference_forward(x, params))

    assert out.shape == (N, C, H, W)
    np.testing.assert_allclose(np.asarray(out), np.asarray(ref), rtol=1e-4, atol=1e-4)
    print("KERNEL_OK")
</pallas_src>

<mosaic_0001>
module attributes {stable_mosaic.version = 11 : i64} {
  func.func @_resblock_kernel(%arg0: i32, %arg1: memref<1x16x16x128xf32, #tpu.memory_space<vmem>>, %arg2: memref<128x128xf32, #tpu.memory_space<vmem>>, %arg3: memref<1x128xf32, #tpu.memory_space<vmem>>, %arg4: memref<1x128xf32, #tpu.memory_space<vmem>>, %arg5: memref<3x3x128x128xf32, #tpu.memory_space<vmem>>, %arg6: memref<1x128xf32, #tpu.memory_space<vmem>>, %arg7: memref<1x128xf32, #tpu.memory_space<vmem>>, %arg8: memref<1x16x16x128xf32, #tpu.memory_space<vmem>>, %arg9: memref<18x24x128xf32, #tpu.memory_space<vmem>>) attributes {dimension_semantics = [#tpu.dimension_semantics<parallel>], iteration_bounds = array<i64: 2>, scalar_prefetch = 0 : i64, scratch_operands = 1 : i64, tpu.core_type = #tpu.core_type<tc>, window_params = [{transform_indices = @transform_0, window_bounds = array<i64: 1, 16, 16, 128>}, {pipeline_mode = #tpu.pipeline_mode<synchronous>, transform_indices = @transform_1, window_bounds = array<i64: 128, 128>}, {pipeline_mode = #tpu.pipeline_mode<synchronous>, transform_indices = @transform_2, window_bounds = array<i64: 1, 128>}, {pipeline_mode = #tpu.pipeline_mode<synchronous>, transform_indices = @transform_3, window_bounds = array<i64: 1, 128>}, {pipeline_mode = #tpu.pipeline_mode<synchronous>, transform_indices = @transform_4, window_bounds = array<i64: 3, 3, 128, 128>}, {pipeline_mode = #tpu.pipeline_mode<synchronous>, transform_indices = @transform_5, window_bounds = array<i64: 1, 128>}, {pipeline_mode = #tpu.pipeline_mode<synchronous>, transform_indices = @transform_6, window_bounds = array<i64: 1, 128>}, {transform_indices = @transform_7, window_bounds = array<i64: 1, 16, 16, 128>}]} {
    %cst = arith.constant 0.000000e+00 : f32
    %0 = vector.broadcast %cst : f32 to vector<1x24x128xf32>
    %c0 = arith.constant 0 : index
    %c0_0 = arith.constant 0 : index
    %c0_1 = arith.constant 0 : index
    %1 = vector.load %arg9[%c0, %c0_0, %c0_1] : memref<18x24x128xf32, #tpu.memory_space<vmem>>, vector<1x24x128xf32>
    tpu.vector_store %arg9[%c0, %c0_0, %c0_1], %0 {strides = array<i32>} : memref<18x24x128xf32, #tpu.memory_space<vmem>>, vector<1x24x128xf32>,
    %cst_2 = arith.constant 0.000000e+00 : f32
    %2 = vector.broadcast %cst_2 : f32 to vector<1x24x128xf32>
    %c17 = arith.constant 17 : index
    %c0_3 = arith.constant 0 : index
    %c0_4 = arith.constant 0 : index
    %3 = vector.load %arg9[%c17, %c0_3, %c0_4] : memref<18x24x128xf32, #tpu.memory_space<vmem>>, vector<1x24x128xf32>
    tpu.vector_store %arg9[%c17, %c0_3, %c0_4], %2 {strides = array<i32>} : memref<18x24x128xf32, #tpu.memory_space<vmem>>, vector<1x24x128xf32>,
    %cst_5 = arith.constant 0.000000e+00 : f32
    %4 = vector.broadcast %cst_5 : f32 to vector<16x1x128xf32>
    %c1 = arith.constant 1 : index
    %c0_6 = arith.constant 0 : index
    %c0_7 = arith.constant 0 : index
    %5 = vector.load %arg9[%c1, %c0_6, %c0_7] : memref<18x24x128xf32, #tpu.memory_space<vmem>>, vector<16x1x128xf32>
    tpu.vector_store %arg9[%c1, %c0_6, %c0_7], %4 {strides = array<i32>} : memref<18x24x128xf32, #tpu.memory_space<vmem>>, vector<16x1x128xf32>,
    %cst_8 = arith.constant 0.000000e+00 : f32
    %6 = vector.broadcast %cst_8 : f32 to vector<16x1x128xf32>
    %c1_9 = arith.constant 1 : index
    %c17_10 = arith.constant 17 : index
    %c0_11 = arith.constant 0 : index
    %7 = vector.load %arg9[%c1_9, %c17_10, %c0_11] : memref<18x24x128xf32, #tpu.memory_space<vmem>>, vector<16x1x128xf32>
    tpu.vector_store %arg9[%c1_9, %c17_10, %c0_11], %6 {strides = array<i32>} : memref<18x24x128xf32, #tpu.memory_space<vmem>>, vector<16x1x128xf32>,
    %c0_12 = arith.constant 0 : index
    %c0_13 = arith.constant 0 : index
    %c0_14 = arith.constant 0 : index
    %c0_15 = arith.constant 0 : index
    %8 = vector.load %arg1[%c0_12, %c0_13, %c0_14, %c0_15] : memref<1x16x16x128xf32, #tpu.memory_space<vmem>>, vector<1x16x16x128xf32>
    %9 = vector.shape_cast %8 : vector<1x16x16x128xf32> to vector<16x16x128xf32>
    %10 = vector.shape_cast %9 : vector<16x16x128xf32> to vector<256x128xf32>
    %c0_16 = arith.constant 0 : index
    %c0_17 = arith.constant 0 : index
    %11 = vector.load %arg2[%c0_16, %c0_17] : memref<128x128xf32, #tpu.memory_space<vmem>>, vector<128x128xf32>
    %cst_18 = arith.constant dense<0.000000e+00> : vector<256x128xf32>
    %12 = tpu.matmul %10, %11, %cst_18 {dimension_numbers = #tpu.dot_dimension_numbers<[1], [0], [0], [1], [0, 0, 1, 1], [], []>} : vector<256x128xf32>, vector<128x128xf32>, vector<256x128xf32> -> vector<256x128xf32>
    %c0_19 = arith.constant 0 : index
    %c0_20 = arith.constant 0 : index
    %13 = vector.load %arg3[%c0_19, %c0_20] : memref<1x128xf32, #tpu.memory_space<vmem>>, vector<1x128xf32>
    %14 = vector.broadcast %13 : vector<1x128xf32> to vector<256x128xf32>
    %15 = arith.mulf %12, %14 : vector<256x128xf32>
    %c0_21 = arith.constant 0 : index
    %c0_22 = arith.constant 0 : index
    %16 = vector.load %arg4[%c0_21, %c0_22] : memref<1x128xf32, #tpu.memory_space<vmem>>, vector<1x128xf32>
    %17 = vector.broadcast %16 : vector<1x128xf32> to vector<256x128xf32>
    %18 = arith.addf %15, %17 : vector<256x128xf32>
    %cst_23 = arith.constant 0.000000e+00 : f32
    %19 = vector.broadcast %cst_23 : f32 to vector<256x128xf32>
    %20 = arith.maximumf %18, %19 : vector<256x128xf32>
    %21 = vector.shape_cast %20 : vector<256x128xf32> to vector<16x16x128xf32>
    %c1_24 = arith.constant 1 : index
    %c1_25 = arith.constant 1 : index
    %c0_26 = arith.constant 0 : index
    %22 = vector.load %arg9[%c1_24, %c1_25, %c0_26] : memref<18x24x128xf32, #tpu.memory_space<vmem>>, vector<16x16x128xf32>
    tpu.vector_store %arg9[%c1_24, %c1_25, %c0_26], %21 {strides = array<i32>} : memref<18x24x128xf32, #tpu.memory_space<vmem>>, vector<16x16x128xf32>,
    %cst_27 = arith.constant 0.000000e+00 : f32
    %23 = vector.broadcast %cst_27 : f32 to vector<256x128xf32>
    %c0_28 = arith.constant 0 : index
    %c0_29 = arith.constant 0 : index
    %c0_30 = arith.constant 0 : index
    %24 = vector.load %arg9[%c0_28, %c0_29, %c0_30] : memref<18x24x128xf32, #tpu.memory_space<vmem>>, vector<16x16x128xf32>
    %25 = vector.shape_cast %24 : vector<16x16x128xf32> to vector<256x128xf32>
    %c0_31 = arith.constant 0 : index
    %c0_32 = arith.constant 0 : index
    %c0_33 = arith.constant 0 : index
    %c0_34 = arith.constant 0 : index
    %26 = vector.load %arg5[%c0_31, %c0_32, %c0_33, %c0_34] : memref<3x3x128x128xf32, #tpu.memory_space<vmem>>, vector<1x1x128x128xf32>
    %27 = vector.shape_cast %26 : vector<1x1x128x128xf32> to vector<128x128xf32>
    %cst_35 = arith.constant dense<0.000000e+00> : vector<256x128xf32>
    %28 = tpu.matmul %25, %27, %cst_35 {dimension_numbers = #tpu.dot_dimension_numbers<[1], [0], [0], [1], [0, 0, 1, 1], [], []>} : vector<256x128xf32>, vector<128x128xf32>, vector<256x128xf32> -> vector<256x128xf32>
    %29 = arith.addf %23, %28 : vector<256x128xf32>
    %c0_36 = arith.constant 0 : index
    %c1_37 = arith.constant 1 : index
    %c0_38 = arith.constant 0 : index
    %30 = vector.load %arg9[%c0_36, %c1_37, %c0_38] : memref<18x24x128xf32, #tpu.memory_space<vmem>>, vector<16x16x128xf32>
    %31 = vector.shape_cast %30 : vector<16x16x128xf32> to vector<256x128xf32>
    %c0_39 = arith.constant 0 : index
    %c1_40 = arith.constant 1 : index
    %c0_41 = arith.constant 0 : index
    %c0_42 = arith.constant 0 : index
    %32 = vector.load %arg5[%c0_39, %c1_40, %c0_41, %c0_42] : memref<3x3x128x128xf32, #tpu.memory_space<vmem>>, vector<1x1x128x128xf32>
    %33 = vector.shape_cast %32 : vector<1x1x128x128xf32> to vector<128x128xf32>
    %cst_43 = arith.constant dense<0.000000e+00> : vector<256x128xf32>
    %34 = tpu.matmul %31, %33, %cst_43 {dimension_numbers = #tpu.dot_dimension_numbers<[1], [0], [0], [1], [0, 0, 1, 1], [], []>} : vector<256x128xf32>, vector<128x128xf32>, vector<256x128xf32> -> vector<256x128xf32>
    %35 = arith.addf %29, %34 : vector<256x128xf32>
    %c0_44 = arith.constant 0 : index
    %c2 = arith.constant 2 : index
    %c0_45 = arith.constant 0 : index
    %36 = vector.load %arg9[%c0_44, %c2, %c0_45] : memref<18x24x128xf32, #tpu.memory_space<vmem>>, vector<16x16x128xf32>
    %37 = vector.shape_cast %36 : vector<16x16x128xf32> to vector<256x128xf32>
    %c0_46 = arith.constant 0 : index
    %c2_47 = arith.constant 2 : index
    %c0_48 = arith.constant 0 : index
    %c0_49 = arith.constant 0 : index
    %38 = vector.load %arg5[%c0_46, %c2_47, %c0_48, %c0_49] : memref<3x3x128x128xf32, #tpu.memory_space<vmem>>, vector<1x1x128x128xf32>
    %39 = vector.shape_cast %38 : vector<1x1x128x128xf32> to vector<128x128xf32>
    %cst_50 = arith.constant dense<0.000000e+00> : vector<256x128xf32>
    %40 = tpu.matmul %37, %39, %cst_50 {dimension_numbers = #tpu.dot_dimension_numbers<[1], [0], [0], [1], [0, 0, 1, 1], [], []>} : vector<256x128xf32>, vector<128x128xf32>, vector<256x128xf32> -> vector<256x128xf32>
    %41 = arith.addf %35, %40 : vector<256x128xf32>
    %c1_51 = arith.constant 1 : index
    %c0_52 = arith.constant 0 : index
    %c0_53 = arith.constant 0 : index
    %42 = vector.load %arg9[%c1_51, %c0_52, %c0_53] : memref<18x24x128xf32, #tpu.memory_space<vmem>>, vector<16x16x128xf32>
    %43 = vector.shape_cast %42 : vector<16x16x128xf32> to vector<256x128xf32>
    %c1_54 = arith.constant 1 : index
    %c0_55 = arith.constant 0 : index
    %c0_56 = arith.constant 0 : index
    %c0_57 = arith.constant 0 : index
    %44 = vector.load %arg5[%c1_54, %c0_55, %c0_56, %c0_57] : memref<3x3x128x128xf32, #tpu.memory_space<vmem>>, vector<1x1x128x128xf32>
    %45 = vector.shape_cast %44 : vector<1x1x128x128xf32> to vector<128x128xf32>
    %cst_58 = arith.constant dense<0.000000e+00> : vector<256x128xf32>
    %46 = tpu.matmul %43, %45, %cst_58 {dimension_numbers = #tpu.dot_dimension_numbers<[1], [0], [0], [1], [0, 0, 1, 1], [], []>} : vector<256x128xf32>, vector<128x128xf32>, vector<256x128xf32> -> vector<256x128xf32>
    %47 = arith.addf %41, %46 : vector<256x128xf32>
    %c1_59 = arith.constant 1 : index
    %c1_60 = arith.constant 1 : index
    %c0_61 = arith.constant 0 : index
    %48 = vector.load %arg9[%c1_59, %c1_60, %c0_61] : memref<18x24x128xf32, #tpu.memory_space<vmem>>, vector<16x16x128xf32>
    %49 = vector.shape_cast %48 : vector<16x16x128xf32> to vector<256x128xf32>
    %c1_62 = arith.constant 1 : index
    %c1_63 = arith.constant 1 : index
    %c0_64 = arith.constant 0 : index
    %c0_65 = arith.constant 0 : index
    %50 = vector.load %arg5[%c1_62, %c1_63, %c0_64, %c0_65] : memref<3x3x128x128xf32, #tpu.memory_space<vmem>>, vector<1x1x128x128xf32>
    %51 = vector.shape_cast %50 : vector<1x1x128x128xf32> to vector<128x128xf32>
    %cst_66 = arith.constant dense<0.000000e+00> : vector<256x128xf32>
    %52 = tpu.matmul %49, %51, %cst_66 {dimension_numbers = #tpu.dot_dimension_numbers<[1], [0], [0], [1], [0, 0, 1, 1], [], []>} : vector<256x128xf32>, vector<128x128xf32>, vector<256x128xf32> -> vector<256x128xf32>
    %53 = arith.addf %47, %52 : vector<256x128xf32>
    %c1_67 = arith.constant 1 : index
    %c2_68 = arith.constant 2 : index
    %c0_69 = arith.constant 0 : index
    %54 = vector.load %arg9[%c1_67, %c2_68, %c0_69] : memref<18x24x128xf32, #tpu.memory_space<vmem>>, vector<16x16x128xf32>
    %55 = vector.shape_cast %54 : vector<16x16x128xf32> to vector<256x128xf32>
    %c1_70 = arith.constant 1 : index
    %c2_71 = arith.constant 2 : index
    %c0_72 = arith.constant 0 : index
    %c0_73 = arith.constant 0 : index
    %56 = vector.load %arg5[%c1_70, %c2_71, %c0_72, %c0_73] : memref<3x3x128x128xf32, #tpu.memory_space<vmem>>, vector<1x1x128x128xf32>
    %57 = vector.shape_cast %56 : vector<1x1x128x128xf32> to vector<128x128xf32>
    %cst_74 = arith.constant dense<0.000000e+00> : vector<256x128xf32>
    %58 = tpu.matmul %55, %57, %cst_74 {dimension_numbers = #tpu.dot_dimension_numbers<[1], [0], [0], [1], [0, 0, 1, 1], [], []>} : vector<256x128xf32>, vector<128x128xf32>, vector<256x128xf32> -> vector<256x128xf32>
    %59 = arith.addf %53, %58 : vector<256x128xf32>
    %c2_75 = arith.constant 2 : index
    %c0_76 = arith.constant 0 : index
    %c0_77 = arith.constant 0 : index
    %60 = vector.load %arg9[%c2_75, %c0_76, %c0_77] : memref<18x24x128xf32, #tpu.memory_space<vmem>>, vector<16x16x128xf32>
    %61 = vector.shape_cast %60 : vector<16x16x128xf32> to vector<256x128xf32>
    %c2_78 = arith.constant 2 : index
    %c0_79 = arith.constant 0 : index
    %c0_80 = arith.constant 0 : index
    %c0_81 = arith.constant 0 : index
    %62 = vector.load %arg5[%c2_78, %c0_79, %c0_80, %c0_81] : memref<3x3x128x128xf32, #tpu.memory_space<vmem>>, vector<1x1x128x128xf32>
    %63 = vector.shape_cast %62 : vector<1x1x128x128xf32> to vector<128x128xf32>
    %cst_82 = arith.constant dense<0.000000e+00> : vector<256x128xf32>
    %64 = tpu.matmul %61, %63, %cst_82 {dimension_numbers = #tpu.dot_dimension_numbers<[1], [0], [0], [1], [0, 0, 1, 1], [], []>} : vector<256x128xf32>, vector<128x128xf32>, vector<256x128xf32> -> vector<256x128xf32>
    %65 = arith.addf %59, %64 : vector<256x128xf32>
    %c2_83 = arith.constant 2 : index
    %c1_84 = arith.constant 1 : index
    %c0_85 = arith.constant 0 : index
    %66 = vector.load %arg9[%c2_83, %c1_84, %c0_85] : memref<18x24x128xf32, #tpu.memory_space<vmem>>, vector<16x16x128xf32>
    %67 = vector.shape_cast %66 : vector<16x16x128xf32> to vector<256x128xf32>
    %c2_86 = arith.constant 2 : index
    %c1_87 = arith.constant 1 : index
    %c0_88 = arith.constant 0 : index
    %c0_89 = arith.constant 0 : index
    %68 = vector.load %arg5[%c2_86, %c1_87, %c0_88, %c0_89] : memref<3x3x128x128xf32, #tpu.memory_space<vmem>>, vector<1x1x128x128xf32>
    %69 = vector.shape_cast %68 : vector<1x1x128x128xf32> to vector<128x128xf32>
    %cst_90 = arith.constant dense<0.000000e+00> : vector<256x128xf32>
    %70 = tpu.matmul %67, %69, %cst_90 {dimension_numbers = #tpu.dot_dimension_numbers<[1], [0], [0], [1], [0, 0, 1, 1], [], []>} : vector<256x128xf32>, vector<128x128xf32>, vector<256x128xf32> -> vector<256x128xf32>
    %71 = arith.addf %65, %70 : vector<256x128xf32>
    %c2_91 = arith.constant 2 : index
    %c2_92 = arith.constant 2 : index
    %c0_93 = arith.constant 0 : index
    %72 = vector.load %arg9[%c2_91, %c2_92, %c0_93] : memref<18x24x128xf32, #tpu.memory_space<vmem>>, vector<16x16x128xf32>
    %73 = vector.shape_cast %72 : vector<16x16x128xf32> to vector<256x128xf32>
    %c2_94 = arith.constant 2 : index
    %c2_95 = arith.constant 2 : index
    %c0_96 = arith.constant 0 : index
    %c0_97 = arith.constant 0 : index
    %74 = vector.load %arg5[%c2_94, %c2_95, %c0_96, %c0_97] : memref<3x3x128x128xf32, #tpu.memory_space<vmem>>, vector<1x1x128x128xf32>
    %75 = vector.shape_cast %74 : vector<1x1x128x128xf32> to vector<128x128xf32>
    %cst_98 = arith.constant dense<0.000000e+00> : vector<256x128xf32>
    %76 = tpu.matmul %73, %75, %cst_98 {dimension_numbers = #tpu.dot_dimension_numbers<[1], [0], [0], [1], [0, 0, 1, 1], [], []>} : vector<256x128xf32>, vector<128x128xf32>, vector<256x128xf32> -> vector<256x128xf32>
    %77 = arith.addf %71, %76 : vector<256x128xf32>
    %c0_99 = arith.constant 0 : index
    %c0_100 = arith.constant 0 : index
    %78 = vector.load %arg6[%c0_99, %c0_100] : memref<1x128xf32, #tpu.memory_space<vmem>>, vector<1x128xf32>
    %79 = vector.broadcast %78 : vector<1x128xf32> to vector<256x128xf32>
    %80 = arith.mulf %77, %79 : vector<256x128xf32>
    %c0_101 = arith.constant 0 : index
    %c0_102 = arith.constant 0 : index
    %81 = vector.load %arg7[%c0_101, %c0_102] : memref<1x128xf32, #tpu.memory_space<vmem>>, vector<1x128xf32>
    %82 = vector.broadcast %81 : vector<1x128xf32> to vector<256x128xf32>
    %83 = arith.addf %80, %82 : vector<256x128xf32>
    %cst_103 = arith.constant 0.000000e+00 : f32
    %84 = vector.broadcast %cst_103 : f32 to vector<256x128xf32>
    %85 = arith.maximumf %83, %84 : vector<256x128xf32>
    %86 = arith.addf %10, %85 : vector<256x128xf32>
    %87 = vector.shape_cast %86 : vector<256x128xf32> to vector<16x16x128xf32>
    %c0_104 = arith.constant 0 : index
    %c0_105 = arith.constant 0 : index
    %c0_106 = arith.constant 0 : index
    %c0_107 = arith.constant 0 : index
    %88 = vector.load %arg8[%c0_104, %c0_105, %c0_106, %c0_107] : memref<1x16x16x128xf32, #tpu.memory_space<vmem>>, vector<1x16x16x128xf32>
    %89 = vector.shape_cast %88 : vector<1x16x16x128xf32> to vector<16x16x128xf32>
    %90 = vector.shape_cast %87 : vector<16x16x128xf32> to vector<1x16x16x128xf32>
    tpu.vector_store %arg8[%c0_104, %c0_105, %c0_106, %c0_107], %90 {strides = array<i32>} : memref<1x16x16x128xf32, #tpu.memory_space<vmem>>, vector<1x16x16x128xf32>,
    return
  }
  func.func @transform_0(%arg0: i32) -> (i32, i32, i32, i32) {
    %c0_i32 = arith.constant 0 : i32
    %c0_i32_0 = arith.constant 0 : i32
    %c0_i32_1 = arith.constant 0 : i32
    %c0_i32_2 = arith.constant 0 : i32
    return %arg0, %c0_i32, %c0_i32_0, %c0_i32_1 : i32, i32, i32, i32
  }
  func.func @transform_1(%arg0: i32) -> (i32, i32) {
    %c0_i32 = arith.constant 0 : i32
    %c0_i32_0 = arith.constant 0 : i32
    %c0_i32_1 = arith.constant 0 : i32
    return %c0_i32, %c0_i32_0 : i32, i32
  }
  func.func @transform_2(%arg0: i32) -> (i32, i32) {
    %c0_i32 = arith.constant 0 : i32
    %c0_i32_0 = arith.constant 0 : i32
    %c0_i32_1 = arith.constant 0 : i32
    return %c0_i32, %c0_i32_0 : i32, i32
  }
  func.func @transform_3(%arg0: i32) -> (i32, i32) {
    %c0_i32 = arith.constant 0 : i32
    %c0_i32_0 = arith.constant 0 : i32
    %c0_i32_1 = arith.constant 0 : i32
    return %c0_i32, %c0_i32_0 : i32, i32
  }
  func.func @transform_4(%arg0: i32) -> (i32, i32, i32, i32) {
    %c0_i32 = arith.constant 0 : i32
    %c0_i32_0 = arith.constant 0 : i32
    %c0_i32_1 = arith.constant 0 : i32
    %c0_i32_2 = arith.constant 0 : i32
    %c0_i32_3 = arith.constant 0 : i32
    return %c0_i32, %c0_i32_0, %c0_i32_1, %c0_i32_2 : i32, i32, i32, i32
  }
  func.func @transform_5(%arg0: i32) -> (i32, i32) {
    %c0_i32 = arith.constant 0 : i32
    %c0_i32_0 = arith.constant 0 : i32
    %c0_i32_1 = arith.constant 0 : i32
    return %c0_i32, %c0_i32_0 : i32, i32
  }
  func.func @transform_6(%arg0: i32) -> (i32, i32) {
    %c0_i32 = arith.constant 0 : i32
    %c0_i32_0 = arith.constant 0 : i32
    %c0_i32_1 = arith.constant 0 : i32
    return %c0_i32, %c0_i32_0 : i32, i32
  }
  func.func @transform_7(%arg0: i32) -> (i32, i32, i32, i32) {
    %c0_i32 = arith.constant 0 : i32
    %c0_i32_0 = arith.constant 0 : i32
    %c0_i32_1 = arith.constant 0 : i32
    %c0_i32_2 = arith.constant 0 : i32
    return %arg0, %c0_i32, %c0_i32_0, %c0_i32_1 : i32, i32, i32, i32
  }
}

</mosaic_0001>

<llo_original>
// kernel: tpu_custom_call.1
$region0: #{tpu_custom_call.1}
  #allocation0 [shape = 'u32[]', space=smem, size = 0x4, offset = 0x4, fixed_abs, tag = 'smem constant byte address 0x4 - core index']
  #allocation1 [shape = 'u32[72,128]{1,0:T(1,128)}', space=vmem, size = 0x9000, scoped, tag = 'internal scratch']
  #allocation2 [shape = 'f32[18,24,128]{2,1,0:T(8,128)}', space=vmem, size = 0x36000, scoped, tag = 'scratch operand']
  %s0 = inlined_call_operand.hbm [shape: f32[2,16,16,128], index: 0, kind: input, shape index: {}]
  %s1 = inlined_call_operand.hbm [shape: f32[128,128], index: 1, kind: input, shape index: {}]
  %s2 = inlined_call_operand.vmem [shape: f32[1,128], index: 2, kind: input, shape index: {}]
  %s3 = inlined_call_operand.vmem [shape: f32[1,128], index: 3, kind: input, shape index: {}]
  %s4 = inlined_call_operand.hbm [shape: f32[3,3,128,128], index: 4, kind: input, shape index: {}]
  %s5 = inlined_call_operand.vmem [shape: f32[1,128], index: 5, kind: input, shape index: {}]
  %s6 = inlined_call_operand.vmem [shape: f32[1,128], index: 6, kind: input, shape index: {}]
  %s7 = inlined_call_operand.hbm [shape: f32[2,16,16,128], index: 7, kind: output, shape index: {}]
  %s8 = sld [smem:[#allocation0]]
  $region73: #{tpu_custom_call.1} parent=0
    _
  %s10 = ssub.s32 1, %s8
  %s11 = scalar_select 0, %s10, %s8
  $region1: #{tpu_custom_call.1} parent=0
    #allocation3 [shape = 'u8[262144]{0}', space=vmem, size = 0x40000, scoped, tag = 'input window, operand 0']
    #allocation4 [shape = 's32[2]{0}', space=sflag, size = 0x8, scoped, tag = 'scoped memory for tpu_custom_call.1']
    #allocation5 [shape = 's32[2]{0}', space=sflag, size = 0x8, scoped, tag = 'scoped memory for tpu_custom_call.1']
    #allocation6 [shape = 'u8[65536]{0}', space=vmem, size = 0x10000, scoped, tag = 'input window, operand 1, single buffered']
    #allocation7 [shape = 's32[1]{0}', space=sflag, size = 0x4, scoped, tag = 'scoped memory for tpu_custom_call.1']
    #allocation8 [shape = 'u8[589824]{0}', space=vmem, size = 0x90000, scoped, tag = 'input window, operand 4, single buffered']
    #allocation9 [shape = 'u8[262144]{0}', space=vmem, size = 0x40000, scoped, tag = 'output window, operand 0']
    %12 = vsyncpa [#allocation4], 0
    %s13 = scalar_lea.sflag [#allocation4], 1
    %14 = vsyncpa %s13, 0
    %15 = vsyncpa [#allocation7], 0
    %16 = vsyncpa [#allocation5], 0
    %s17 = scalar_lea.sflag [#allocation5], 1
    %18 = vsyncpa %s17, 0
    loop: start=0, step=1, limit=4
    $region2: #{tpu_custom_call.1} parent=1 // loop_pre_header
      _
    $region3: #{tpu_custom_call.1} parent=1 // loop_header
      %s20 = sphi 0, %s24
      %p21 = scmp.ge.s32.totalorder %s20, 4
      %s30 = sphi 0, %s32
      %s33 = sphi 0, %s30
      %s34 = sphi 0, %s33
      %s50 = sphi 0, %s34
      %s54 = sphi 0, %s54
      %s56 = sphi 0, %s54
      %s57 = sphi 0, %s56
      %s71 = sphi 0, %s57
      %s75 = sphi 0, %s75
      %s77 = sphi 0, %s75
      %s78 = sphi 0, %s77
      %s92 = sphi 0, %s78
      %s96 = sphi 0, %s96
      %s98 = sphi 0, %s96
      %s99 = sphi 0, %s98
      %s113 = sphi 0, %s99
      %s117 = sphi 0, %s117
      %s119 = sphi 0, %s117
      %s120 = sphi 0, %s119
      %s134 = sphi 0, %s120
      %s138 = sphi 0, %s138
      %s140 = sphi 0, %s138
      %s141 = sphi 0, %s140
      %s155 = sphi 0, %s141
      %s159 = sphi 0, %s159
      %s161 = sphi 0, %s159
      %s162 = sphi 0, %s161
      %s176 = sphi 0, %s162
      %s182 = sphi 0, %s184
      %s185 = sphi 0, %s182
      %s186 = sphi 0, %s185
      %s202 = sphi 0, %s186
    $region4: #{tpu_custom_call.1} parent=1 // loop_header_branch
      %23 = sbr.rel (%p21) target = $region8
    $region5: #{tpu_custom_call.1} parent=1 // loop_body
      %s25 = ssub.s32 %s20, 1
      %s26 = ssub.s32 %s20, 2
      %s27 = sadd.s32 %s20, 1
      %s28 = ssub.s32 %s20, %s27
      %p29 = scmp.eq.s32.totalorder %s28, 0
      %s31 = sadd.s32 %s30, 1
      %s32 = scalar_select %p29, %s30, %s31
      %p35 = pneg %p29
      %p36 = scmp.eq.s32.totalorder %s20, 1
      %p37 = por %p35, %p36
      %p38 = scmp.ne.s32.totalorder %s30, %s33
      %p39 = scmp.eq.s32.totalorder %s20, 0
      %p40 = por %p38, %p39
      %p41 = scmp.ne.s32.totalorder %s30, %s33
      %p42 = scmp.eq.s32.totalorder %s25, 1
      %p43 = por %p41, %p42
      %p44 = scmp.ne.s32.totalorder %s33, %s34
      %p45 = scmp.eq.s32.totalorder %s25, 0
      %p46 = por %p44, %p45
      %p47 = scmp.ne.s32.totalorder %s33, %s34
      %p48 = scmp.eq.s32.totalorder %s26, 1
      %p49 = por %p47, %p48
      %p51 = scmp.ne.s32.totalorder %s34, %s50
      %p52 = scmp.eq.s32.totalorder %s26, 0
      %p53 = por %p51, %p52
      %s55 = sadd.s32 %s54, 1
      %p58 = scmp.eq.s32.totalorder %s20, 1
      %p59 = scmp.ne.s32.totalorder %s54, %s56
      %p60 = scmp.eq.s32.totalorder %s20, 0
      %p61 = por %p59, %p60
      %p62 = scmp.ne.s32.totalorder %s54, %s56
      %p63 = scmp.eq.s32.totalorder %s25, 1
      %p64 = por %p62, %p63
      %p65 = scmp.ne.s32.totalorder %s56, %s57
      %p66 = scmp.eq.s32.totalorder %s25, 0
      %p67 = por %p65, %p66
      %p68 = scmp.ne.s32.totalorder %s56, %s57
      %p69 = scmp.eq.s32.totalorder %s26, 1
      %p70 = por %p68, %p69
      %p72 = scmp.ne.s32.totalorder %s57, %s71
      %p73 = scmp.eq.s32.totalorder %s26, 0
      %p74 = por %p72, %p73
      %s76 = sadd.s32 %s75, 1
      %p79 = scmp.eq.s32.totalorder %s20, 1
      %p80 = scmp.ne.s32.totalorder %s75, %s77
      %p81 = scmp.eq.s32.totalorder %s20, 0
      %p82 = por %p80, %p81
      %p83 = scmp.ne.s32.totalorder %s75, %s77
      %p84 = scmp.eq.s32.totalorder %s25, 1
      %p85 = por %p83, %p84
      %p86 = scmp.ne.s32.totalorder %s77, %s78
      %p87 = scmp.eq.s32.totalorder %s25, 0
      %p88 = por %p86, %p87
      %p89 = scmp.ne.s32.totalorder %s77, %s78
      %p90 = scmp.eq.s32.totalorder %s26, 1
      %p91 = por %p89, %p90
      %p93 = scmp.ne.s32.totalorder %s78, %s92
      %p94 = scmp.eq.s32.totalorder %s26, 0
      %p95 = por %p93, %p94
      %s97 = sadd.s32 %s96, 1
      %p100 = scmp.eq.s32.totalorder %s20, 1
      %p101 = scmp.ne.s32.totalorder %s96, %s98
      %p102 = scmp.eq.s32.totalorder %s20, 0
      %p103 = por %p101, %p102
      %p104 = scmp.ne.s32.totalorder %s96, %s98
      %p105 = scmp.eq.s32.totalorder %s25, 1
      %p106 = por %p104, %p105
      %p107 = scmp.ne.s32.totalorder %s98, %s99
      %p108 = scmp.eq.s32.totalorder %s25, 0
      %p109 = por %p107, %p108
      %p110 = scmp.ne.s32.totalorder %s98, %s99
      %p111 = scmp.eq.s32.totalorder %s26, 1
      %p112 = por %p110, %p111
      %p114 = scmp.ne.s32.totalorder %s99, %s113
      %p115 = scmp.eq.s32.totalorder %s26, 0
      %p116 = por %p114, %p115
      %s118 = sadd.s32 %s117, 1
      %p121 = scmp.eq.s32.totalorder %s20, 1
      %p122 = scmp.ne.s32.totalorder %s117, %s119
      %p123 = scmp.eq.s32.totalorder %s20, 0
      %p124 = por %p122, %p123
      %p125 = scmp.ne.s32.totalorder %s117, %s119
      %p126 = scmp.eq.s32.totalorder %s25, 1
      %p127 = por %p125, %p126
      %p128 = scmp.ne.s32.totalorder %s119, %s120
      %p129 = scmp.eq.s32.totalorder %s25, 0
      %p130 = por %p128, %p129
      %p131 = scmp.ne.s32.totalorder %s119, %s120
      %p132 = scmp.eq.s32.totalorder %s26, 1
      %p133 = por %p131, %p132
      %p135 = scmp.ne.s32.totalorder %s120, %s134
      %p136 = scmp.eq.s32.totalorder %s26, 0
      %p137 = por %p135, %p136
      %s139 = sadd.s32 %s138, 1
      %p142 = scmp.eq.s32.totalorder %s20, 1
      %p143 = scmp.ne.s32.totalorder %s138, %s140
      %p144 = scmp.eq.s32.totalorder %s20, 0
      %p145 = por %p143, %p144
      %p146 = scmp.ne.s32.totalorder %s138, %s140
      %p147 = scmp.eq.s32.totalorder %s25, 1
      %p148 = por %p146, %p147
      %p149 = scmp.ne.s32.totalorder %s140, %s141
      %p150 = scmp.eq.s32.totalorder %s25, 0
      %p151 = por %p149, %p150
      %p152 = scmp.ne.s32.totalorder %s140, %s141
      %p153 = scmp.eq.s32.totalorder %s26, 1
      %p154 = por %p152, %p153
      %p156 = scmp.ne.s32.totalorder %s141, %s155
      %p157 = scmp.eq.s32.totalorder %s26, 0
      %p158 = por %p156, %p157
      %s160 = sadd.s32 %s159, 1
      %p163 = scmp.eq.s32.totalorder %s20, 1
      %p164 = scmp.ne.s32.totalorder %s159, %s161
      %p165 = scmp.eq.s32.totalorder %s20, 0
      %p166 = por %p164, %p165
      %p167 = scmp.ne.s32.totalorder %s159, %s161
      %p168 = scmp.eq.s32.totalorder %s25, 1
      %p169 = por %p167, %p168
      %p170 = scmp.ne.s32.totalorder %s161, %s162
      %p171 = scmp.eq.s32.totalorder %s25, 0
      %p172 = por %p170, %p171
      %p173 = scmp.ne.s32.totalorder %s161, %s162
      %p174 = scmp.eq.s32.totalorder %s26, 1
      %p175 = por %p173, %p174
      %p177 = scmp.ne.s32.totalorder %s162, %s176
      %p178 = scmp.eq.s32.totalorder %s26, 0
      %p179 = por %p177, %p178
      %s180 = ssub.s32 %s20, %s27
      %p181 = scmp.eq.s32.totalorder %s180, 0
      %s183 = sadd.s32 %s182, 1
      %s184 = scalar_select %p181, %s182, %s183
      %p187 = pneg %p181
      %p188 = scmp.eq.s32.totalorder %s20, 1
      %p189 = por %p187, %p188
      %p190 = scmp.ne.s32.totalorder %s182, %s185
      %p191 = scmp.eq.s32.totalorder %s20, 0
      %p192 = por %p190, %p191
      %p193 = scmp.ne.s32.totalorder %s182, %s185
      %p194 = scmp.eq.s32.totalorder %s25, 1
      %p195 = por %p193, %p194
      %p196 = scmp.ne.s32.totalorder %s185, %s186
      %p197 = scmp.eq.s32.totalorder %s25, 0
      %p198 = por %p196, %p197
      %p199 = scmp.ne.s32.totalorder %s185, %s186
      %p200 = scmp.eq.s32.totalorder %s26, 1
      %p201 = por %p199, %p200
      %p203 = scmp.ne.s32.totalorder %s186, %s202
      %p204 = scmp.eq.s32.totalorder %s26, 0
      %p205 = por %p203, %p204
      %p206 = scmp.le.s32.totalorder 1, %s20
      %p207 = scmp.lt.s32.totalorder %s20, 3
      %p208 = pnand %p206, %p207
      %p209 = pneg %p208
      // Predicated region
      $region9: #{tpu_custom_call.1} parent=5 // pred_check
        _
      $region10: #{tpu_custom_call.1} parent=5 // pred_check_branch
        %211 = sbr.rel (%p208) target = $region12
      $region11: #{tpu_custom_call.1} parent=5 // pred_region
        %s212 = ssub.s32 %s20, 1
        // Predicated region
        $region13: #{tpu_custom_call.1} parent=11 // pred_check
          %p213 = pneg %p67
        $region14: #{tpu_custom_call.1} parent=11 // pred_check_branch
          %215 = sbr.rel (%p213) target = $region16
        $region15: #{tpu_custom_call.1} parent=11 // pred_region
          %217 = vsyncadd [#allocation7], 0
          %s218 = sshll.u32 %s1, 4
          %s219 = int_to_ptr.hbm [resolvable:$true] %s218
          %s220 = sshll.u32 [#allocation6], 4
          %s221 = int_to_ptr.vmem [resolvable:$true] %s220
          %226 = dma.hbm_to_vmem [thread:$0]  %s219, 2048, %s221, [#allocation7], 128, 128, 8
        $region16: #{tpu_custom_call.1} parent=11 // pred_fallthru
          _
        // Predicated region
        $region17: #{tpu_custom_call.1} parent=11 // pred_check
          %p227 = pneg %p88
        $region18: #{tpu_custom_call.1} parent=11 // pred_check_branch
          %229 = sbr.rel (%p227) target = $region20
        $region19: #{tpu_custom_call.1} parent=11 // pred_region
          _
        $region20: #{tpu_custom_call.1} parent=11 // pred_fallthru
          _
        // Predicated region
        $region21: #{tpu_custom_call.1} parent=11 // pred_check
          %p230 = pneg %p109
        $region22: #{tpu_custom_call.1} parent=11 // pred_check_branch
          %232 = sbr.rel (%p230) target = $region24
        $region23: #{tpu_custom_call.1} parent=11 // pred_region
          _
        $region24: #{tpu_custom_call.1} parent=11 // pred_fallthru
          _
        // Predicated region
        $region25: #{tpu_custom_call.1} parent=11 // pred_check
          %p233 = pneg %p130
        $region26: #{tpu_custom_call.1} parent=11 // pred_check_branch
          %235 = sbr.rel (%p233) target = $region28
        $region27: #{tpu_custom_call.1} parent=11 // pred_region
          %237 = vsyncadd [#allocation7], 0
          %s238 = sshll.u32 %s4, 4
          %s239 = int_to_ptr.hbm [resolvable:$true] %s238
          %s240 = sshll.u32 [#allocation8], 4
          %s241 = int_to_ptr.vmem [resolvable:$true] %s240
          %246 = dma.hbm_to_vmem [thread:$0]  %s239, 18432, %s241, [#allocation7], 128, 128, 8
        $region28: #{tpu_custom_call.1} parent=11 // pred_fallthru
          _
        // Predicated region
        $region29: #{tpu_custom_call.1} parent=11 // pred_check
          %p247 = pneg %p151
        $region30: #{tpu_custom_call.1} parent=11 // pred_check_branch
          %249 = sbr.rel (%p247) target = $region32
        $region31: #{tpu_custom_call.1} parent=11 // pred_region
          _
        $region32: #{tpu_custom_call.1} parent=11 // pred_fallthru
          _
        // Predicated region
        $region33: #{tpu_custom_call.1} parent=11 // pred_check
          %p250 = pneg %p172
        $region34: #{tpu_custom_call.1} parent=11 // pred_check_branch
          %252 = sbr.rel (%p250) target = $region36
        $region35: #{tpu_custom_call.1} parent=11 // pred_region
          _
        $region36: #{tpu_custom_call.1} parent=11 // pred_fallthru
          _
      $region12: #{tpu_custom_call.1} parent=5 // pred_fallthru
        _
      %p253 = scmp.lt.s32.totalorder %s20, 2
      // Predicated region
      $region37: #{tpu_custom_call.1} parent=5 // pred_check
        %p254 = pneg %p253
      $region38: #{tpu_custom_call.1} parent=5 // pred_check_branch
        %256 = sbr.rel (%p254) target = $region40
      $region39: #{tpu_custom_call.1} parent=5 // pred_region
        // Predicated region
        $region41: #{tpu_custom_call.1} parent=39 // pred_check
          %p257 = pneg %p40
        $region42: #{tpu_custom_call.1} parent=39 // pred_check_branch
          %259 = sbr.rel (%p257) target = $region44
        $region43: #{tpu_custom_call.1} parent=39 // pred_region
          %s260 = sand.u32 %s30, 1
          %s261 = scalar_lea.sflag [#allocation4], %s260
          %s262 = sand.u32 %s30, 1
          %s263 = smul.addr %s262, 256
          %s264 = scalar_lea.vmem [#allocation3], %s263
          %266 = vsyncadd %s261, 0
          %s267 = smul.addr %s20, 32
          %s268 = smul.addr %s267, 8
          %s269 = scalar_lea.hbm %s0, %s268
          %s270 = sshll.u32 %s269, 4
          %s271 = int_to_ptr.hbm [resolvable:$true] %s270
          %s272 = sshll.u32 %s264, 4
          %s273 = int_to_ptr.vmem [resolvable:$true] %s272
          %278 = dma.hbm_to_vmem [thread:$0]  %s271, 4096, %s273, %s261, 128, 128, 8
        $region44: #{tpu_custom_call.1} parent=39 // pred_fallthru
          _
      $region40: #{tpu_custom_call.1} parent=5 // pred_fallthru
        _
      %p279 = scmp.le.s32.totalorder 1, %s20
      %p280 = scmp.lt.s32.totalorder %s20, 3
      %p281 = pnand %p279, %p280
      %p282 = pneg %p281
      // Predicated region
      $region45: #{tpu_custom_call.1} parent=5 // pred_check
        _
      $region46: #{tpu_custom_call.1} parent=5 // pred_check_branch
        %284 = sbr.rel (%p281) target = $region48
      $region47: #{tpu_custom_call.1} parent=5 // pred_region
        %s285 = ssub.s32 %s20, 1
        %s286 = sand.u32 %s33, 1
        %s287 = scalar_lea.sflag [#allocation4], %s286
        %s288 = sand.u32 %s33, 1
        %s289 = smul.addr %s288, 256
        %s290 = scalar_lea.vmem [#allocation3], %s289
        // Predicated region
        $region49: #{tpu_custom_call.1} parent=47 // pred_check
          %p291 = pneg %p46
        $region50: #{tpu_custom_call.1} parent=47 // pred_check_branch
          %293 = sbr.rel (%p291) target = $region52
        $region51: #{tpu_custom_call.1} parent=47 // pred_region
          %295 = dma.done %s287, 4096
        $region52: #{tpu_custom_call.1} parent=47 // pred_fallthru
          _
        // Predicated region
        $region53: #{tpu_custom_call.1} parent=47 // pred_check
          %p296 = pneg %p67
        $region54: #{tpu_custom_call.1} parent=47 // pred_check_branch
          %298 = sbr.rel (%p296) target = $region56
        $region55: #{tpu_custom_call.1} parent=47 // pred_region
          %300 = dma.done [#allocation7], 2048
        $region56: #{tpu_custom_call.1} parent=47 // pred_fallthru
          _
        // Predicated region
        $region57: #{tpu_custom_call.1} parent=47 // pred_check
          %p301 = pneg %p130
        $region58: #{tpu_custom_call.1} parent=47 // pred_check_branch
          %303 = sbr.rel (%p301) target = $region60
        $region59: #{tpu_custom_call.1} parent=47 // pred_region
          %305 = dma.done [#allocation7], 18432
        $region60: #{tpu_custom_call.1} parent=47 // pred_fallthru
          _
        %s306 = sand.u32 %s33, 1
        %s307 = scalar_lea.sflag [#allocation4], %s306
        %s308 = sand.u32 %s33, 1
        %s309 = smul.addr %s308, 256
        %s310 = scalar_lea.vmem [#allocation3], %s309
        %p311 = pneg %p46
        %p312 = pneg %p43
        %p313 = pneg %p67
        %p314 = pneg %p64
        %p315 = pneg %p88
        %p316 = pneg %p85
        %p317 = pneg %p109
        %p318 = pneg %p106
        %p319 = pneg %p130
        %p320 = pneg %p127
        %p321 = pneg %p151
        %p322 = pneg %p148
        %p323 = pneg %p172
        %p324 = pneg %p169
        %p325 = pneg %p198
        %p326 = pneg %p195
        %s327 = sand.u32 %s185, 1
        %s328 = scalar_lea.sflag [#allocation5], %s327
        %s329 = sand.u32 %s185, 1
        %s330 = smul.addr %s329, 256
        %s331 = scalar_lea.vmem [#allocation9], %s330
        %332 = vst [vmem:[#allocation2] sm:$0xff] 0.0
        %333 = vst [vmem:[#allocation2 + $0x8] sm:$0xff] 0.0
        %334 = vst [vmem:[#allocation2 + $0x10] sm:$0xff] 0.0
        %s335 = scalar_lea.vmem [#allocation2], 408
        %336 = vst [vmem:[%s335] sm:$0xff] 0.0
        %337 = vst [vmem:[%s335 + $0x8] sm:$0xff] 0.0
        %338 = vst [vmem:[%s335 + $0x10] sm:$0xff] 0.0
        %s339 = scalar_lea.vmem [#allocation2], 24
        %340 = vst [vmem:[%s339] sm:$0x1] 0.0
        %341 = vst [vmem:[%s339 + $0x18] sm:$0x1] 0.0
        %342 = vst [vmem:[%s339 + $0x30] sm:$0x1] 0.0
        %343 = vst [vmem:[%s339 + $0x48] sm:$0x1] 0.0
        %344 = vst [vmem:[%s339 + $0x60] sm:$0x1] 0.0
        %345 = vst [vmem:[%s339 + $0x78] sm:$0x1] 0.0
        %346 = vst [vmem:[%s339 + $0x90] sm:$0x1] 0.0
        %347 = vst [vmem:[%s339 + $0xa8] sm:$0x1] 0.0
        %348 = vst [vmem:[%s339 + $0xc0] sm:$0x1] 0.0
        %349 = vst [vmem:[%s339 + $0xd8] sm:$0x1] 0.0
        %350 = vst [vmem:[%s339 + $0xf0] sm:$0x1] 0.0
        %351 = vst [vmem:[%s339 + $0x108] sm:$0x1] 0.0
        %352 = vst [vmem:[%s339 + $0x120] sm:$0x1] 0.0
        %353 = vst [vmem:[%s339 + $0x138] sm:$0x1] 0.0
        %354 = vst [vmem:[%s339 + $0x150] sm:$0x1] 0.0
        %355 = vst [vmem:[%s339 + $0x168] sm:$0x1] 0.0
        %356 = vst [vmem:[%s339 + $0x11] sm:$0x1] 0.0
        %357 = vst [vmem:[%s339 + $0x29] sm:$0x1] 0.0
        %358 = vst [vmem:[%s339 + $0x41] sm:$0x1] 0.0
        %359 = vst [vmem:[%s339 + $0x59] sm:$0x1] 0.0
        %360 = vst [vmem:[%s339 + $0x71] sm:$0x1] 0.0
        %361 = vst [vmem:[%s339 + $0x89] sm:$0x1] 0.0
        %362 = vst [vmem:[%s339 + $0xa1] sm:$0x1] 0.0
        %363 = vst [vmem:[%s339 + $0xb9] sm:$0x1] 0.0
        %364 = vst [vmem:[%s339 + $0xd1] sm:$0x1] 0.0
        %365 = vst [vmem:[%s339 + $0xe9] sm:$0x1] 0.0
        %366 = vst [vmem:[%s339 + $0x101] sm:$0x1] 0.0
        %367 = vst [vmem:[%s339 + $0x119] sm:$0x1] 0.0
        %368 = vst [vmem:[%s339 + $0x131] sm:$0x1] 0.0
        %369 = vst [vmem:[%s339 + $0x149] sm:$0x1] 0.0
        %370 = vst [vmem:[%s339 + $0x161] sm:$0x1] 0.0
        %371 = vst [vmem:[%s339 + $0x179] sm:$0x1] 0.0
        %v372 = vld [vmem:[%s290] sm:$0xff]
        %v373 = vld [vmem:[%s290 + $0x8] sm:$0xff]
        %v374 = vld [vmem:[%s290 + $0x10] sm:$0xff]
        %v375 = vld [vmem:[%s290 + $0x18] sm:$0xff]
        %v376 = vld [vmem:[%s290 + $0x20] sm:$0xff]
        %v377 = vld [vmem:[%s290 + $0x28] sm:$0xff]
        %v378 = vld [vmem:[%s290 + $0x30] sm:$0xff]
        %v379 = vld [vmem:[%s290 + $0x38] sm:$0xff]
        %v380 = vld [vmem:[%s290 + $0x40] sm:$0xff]
        %v381 = vld [vmem:[%s290 + $0x48] sm:$0xff]
        %v382 = vld [vmem:[%s290 + $0x50] sm:$0xff]
        %v383 = vld [vmem:[%s290 + $0x58] sm:$0xff]
        %v384 = vld [vmem:[%s290 + $0x60] sm:$0xff]
        %v385 = vld [vmem:[%s290 + $0x68] sm:$0xff]
        %v386 = vld [vmem:[%s290 + $0x70] sm:$0xff]
        %v387 = vld [vmem:[%s290 + $0x78] sm:$0xff]
        %v388 = vld [vmem:[%s290 + $0x80] sm:$0xff]
        %v389 = vld [vmem:[%s290 + $0x88] sm:$0xff]
        %v390 = vld [vmem:[%s290 + $0x90] sm:$0xff]
        %v391 = vld [vmem:[%s290 + $0x98] sm:$0xff]
        %v392 = vld [vmem:[%s290 + $0xa0] sm:$0xff]
        %v393 = vld [vmem:[%s290 + $0xa8] sm:$0xff]
        %v394 = vld [vmem:[%s290 + $0xb0] sm:$0xff]
        %v395 = vld [vmem:[%s290 + $0xb8] sm:$0xff]
        %v396 = vld [vmem:[%s290 + $0xc0] sm:$0xff]
        %v397 = vld [vmem:[%s290 + $0xc8] sm:$0xff]
        %v398 = vld [vmem:[%s290 + $0xd0] sm:$0xff]
        %v399 = vld [vmem:[%s290 + $0xd8] sm:$0xff]
        %v400 = vld [vmem:[%s290 + $0xe0] sm:$0xff]
        %v401 = vld [vmem:[%s290 + $0xe8] sm:$0xff]
        %v402 = vld [vmem:[%s290 + $0xf0] sm:$0xff]
        %v403 = vld [vmem:[%s290 + $0xf8] sm:$0xff]
        %v404 = vld [vmem:[#allocation6] sm:$0xff]
        %v405 = vld [vmem:[#allocation6 + $0x8] sm:$0xff]
        %v406 = vld [vmem:[#allocation6 + $0x10] sm:$0xff]
        %v407 = vld [vmem:[#allocation6 + $0x18] sm:$0xff]
        %v408 = vld [vmem:[#allocation6 + $0x20] sm:$0xff]
        %v409 = vld [vmem:[#allocation6 + $0x28] sm:$0xff]
        %v410 = vld [vmem:[#allocation6 + $0x30] sm:$0xff]
        %v411 = vld [vmem:[#allocation6 + $0x38] sm:$0xff]
        %v412 = vld [vmem:[#allocation6 + $0x40] sm:$0xff]
        %v413 = vld [vmem:[#allocation6 + $0x48] sm:$0xff]
        %v414 = vld [vmem:[#allocation6 + $0x50] sm:$0xff]
        %v415 = vld [vmem:[#allocation6 + $0x58] sm:$0xff]
        %v416 = vld [vmem:[#allocation6 + $0x60] sm:$0xff]
        %v417 = vld [vmem:[#allocation6 + $0x68] sm:$0xff]
        %v418 = vld [vmem:[#allocation6 + $0x70] sm:$0xff]
        %v419 = vld [vmem:[#allocation6 + $0x78] sm:$0xff]
        %420 = vmatpush.msra.mxu0 %v419
        %421 = vmatpush.msra.mxu0 %v418
        %422 = vmatpush.msra.mxu0 %v417
        %423 = vmatpush.msra.mxu0 %v416
        %424 = vmatpush.msra.mxu0 %v415
        %425 = vmatpush.msra.mxu0 %v414
        %426 = vmatpush.msra.mxu0 %v413
        %427 = vmatpush.msra.mxu0 %v412
        %428 = vmatpush.msra.mxu0 %v411
        %429 = vmatpush.msra.mxu0 %v410
        %430 = vmatpush.msra.mxu0 %v409
        %431 = vmatpush.msra.mxu0 %v408
        %432 = vmatpush.msra.mxu0 %v407
        %433 = vmatpush.msra.mxu0 %v406
        %434 = vmatpush.msra.mxu0 %v405
        %435 = vmatpush.msra.mxu0 %v404
        %436 = vmatmul.f32.gmra.mxu0 %v372
        %v437 = vpop.f32.mrf.mxu0
        %v438 = vadd.f32 0.0, %v437
        %439 = vmatmul.f32.gmra.mxu0 %v373
        %v440 = vpop.f32.mrf.mxu0
        %v441 = vadd.f32 0.0, %v440
        %442 = vmatmul.f32.gmra.mxu0 %v374
        %v443 = vpop.f32.mrf.mxu0
        %v444 = vadd.f32 0.0, %v443
        %445 = vmatmul.f32.gmra.mxu0 %v375
        %v446 = vpop.f32.mrf.mxu0
        %v447 = vadd.f32 0.0, %v446
        %448 = vmatmul.f32.gmra.mxu0 %v376
        %v449 = vpop.f32.mrf.mxu0
        %v450 = vadd.f32 0.0, %v449
        %451 = vmatmul.f32.gmra.mxu0 %v377
        %v452 = vpop.f32.mrf.mxu0
        %v453 = vadd.f32 0.0, %v452
        %454 = vmatmul.f32.gmra.mxu0 %v378
        %v455 = vpop.f32.mrf.mxu0
        %v456 = vadd.f32 0.0, %v455
        %457 = vmatmul.f32.gmra.mxu0 %v379
        %v458 = vpop.f32.mrf.mxu0
        %v459 = vadd.f32 0.0, %v458
        %460 = vmatmul.f32.gmra.mxu0 %v380
        %v461 = vpop.f32.mrf.mxu0
        %v462 = vadd.f32 0.0, %v461
        %463 = vmatmul.f32.gmra.mxu0 %v381
        %v464 = vpop.f32.mrf.mxu0
        %v465 = vadd.f32 0.0, %v464
        %466 = vmatmul.f32.gmra.mxu0 %v382
        %v467 = vpop.f32.mrf.mxu0
        %v468 = vadd.f32 0.0, %v467
        %469 = vmatmul.f32.gmra.mxu0 %v383
        %v470 = vpop.f32.mrf.mxu0
        %v471 = vadd.f32 0.0, %v470
        %472 = vmatmul.f32.gmra.mxu0 %v384
        %v473 = vpop.f32.mrf.mxu0
        %v474 = vadd.f32 0.0, %v473
        %475 = vmatmul.f32.gmra.mxu0 %v385
        %v476 = vpop.f32.mrf.mxu0
        %v477 = vadd.f32 0.0, %v476
        %478 = vmatmul.f32.gmra.mxu0 %v386
        %v479 = vpop.f32.mrf.mxu0
        %v480 = vadd.f32 0.0, %v479
        %481 = vmatmul.f32.gmra.mxu0 %v387
        %v482 = vpop.f32.mrf.mxu0
        %v483 = vadd.f32 0.0, %v482
        %484 = vmatmul.f32.gmra.mxu0 %v388
        %v485 = vpop.f32.mrf.mxu0
        %v486 = vadd.f32 0.0, %v485
        %487 = vmatmul.f32.gmra.mxu0 %v389
        %v488 = vpop.f32.mrf.mxu0
        %v489 = vadd.f32 0.0, %v488
        %490 = vmatmul.f32.gmra.mxu0 %v390
        %v491 = vpop.f32.mrf.mxu0
        %v492 = vadd.f32 0.0, %v491
        %493 = vmatmul.f32.gmra.mxu0 %v391
        %v494 = vpop.f32.mrf.mxu0
        %v495 = vadd.f32 0.0, %v494
        %496 = vmatmul.f32.gmra.mxu0 %v392
        %v497 = vpop.f32.mrf.mxu0
        %v498 = vadd.f32 0.0, %v497
        %499 = vmatmul.f32.gmra.mxu0 %v393
        %v500 = vpop.f32.mrf.mxu0
        %v501 = vadd.f32 0.0, %v500
        %502 = vmatmul.f32.gmra.mxu0 %v394
        %v503 = vpop.f32.mrf.mxu0
        %v504 = vadd.f32 0.0, %v503
        %505 = vmatmul.f32.gmra.mxu0 %v395
        %v506 = vpop.f32.mrf.mxu0
        %v507 = vadd.f32 0.0, %v506
        %508 = vmatmul.f32.gmra.mxu0 %v396
        %v509 = vpop.f32.mrf.mxu0
        %v510 = vadd.f32 0.0, %v509
        %511 = vmatmul.f32.gmra.mxu0 %v397
        %v512 = vpop.f32.mrf.mxu0
        %v513 = vadd.f32 0.0, %v512
        %514 = vmatmul.f32.gmra.mxu0 %v398
        %v515 = vpop.f32.mrf.mxu0
        %v516 = vadd.f32 0.0, %v515
        %517 = vmatmul.f32.gmra.mxu0 %v399
        %v518 = vpop.f32.mrf.mxu0
        %v519 = vadd.f32 0.0, %v518
        %520 = vmatmul.f32.gmra.mxu0 %v400
        %v521 = vpop.f32.mrf.mxu0
        %v522 = vadd.f32 0.0, %v521
        %523 = vmatmul.f32.gmra.mxu0 %v401
        %v524 = vpop.f32.mrf.mxu0
        %v525 = vadd.f32 0.0, %v524
        %526 = vmatmul.f32.gmra.mxu0 %v402
        %v527 = vpop.f32.mrf.mxu0
        %v528 = vadd.f32 0.0, %v527
        %529 = vmatmul.f32.gmra.mxu0 %v403
        %v530 = vpop.f32.mrf.mxu0
        %v531 = vadd.f32 0.0, %v530
        %532 = vdwg.mxu0
        %v533 = vld [vmem:[%s2] sm:$0x1]
        %v535 = vperm.slane %v533, 0
        %v537 = vmul.f32 %v438, %v535
        %v538 = vmul.f32 %v441, %v535
        %v539 = vmul.f32 %v444, %v535
        %v540 = vmul.f32 %v447, %v535
        %v541 = vmul.f32 %v450, %v535
        %v542 = vmul.f32 %v453, %v535
        %v543 = vmul.f32 %v456, %v535
        %v544 = vmul.f32 %v459, %v535
        %v545 = vmul.f32 %v462, %v535
        %v546 = vmul.f32 %v465, %v535
        %v547 = vmul.f32 %v468, %v535
        %v548 = vmul.f32 %v471, %v535
        %v549 = vmul.f32 %v474, %v535
        %v550 = vmul.f32 %v477, %v535
        %v551 = vmul.f32 %v480, %v535
        %v552 = vmul.f32 %v483, %v535
        %v553 = vmul.f32 %v486, %v535
        %v554 = vmul.f32 %v489, %v535
        %v555 = vmul.f32 %v492, %v535
        %v556 = vmul.f32 %v495, %v535
        %v557 = vmul.f32 %v498, %v535
        %v558 = vmul.f32 %v501, %v535
        %v559 = vmul.f32 %v504, %v535
        %v560 = vmul.f32 %v507, %v535
        %v561 = vmul.f32 %v510, %v535
        %v562 = vmul.f32 %v513, %v535
        %v563 = vmul.f32 %v516, %v535
        %v564 = vmul.f32 %v519, %v535
        %v565 = vmul.f32 %v522, %v535
        %v566 = vmul.f32 %v525, %v535
        %v567 = vmul.f32 %v528, %v535
        %v568 = vmul.f32 %v531, %v535
        %v569 = vld [vmem:[%s3] sm:$0x1]
        %v571 = vperm.slane %v569, 0
        %v573 = vadd.f32 %v537, %v571
        %v574 = vadd.f32 %v538, %v571
        %v575 = vadd.f32 %v539, %v571
        %v576 = vadd.f32 %v540, %v571
        %v577 = vadd.f32 %v541, %v571
        %v578 = vadd.f32 %v542, %v571
        %v579 = vadd.f32 %v543, %v571
        %v580 = vadd.f32 %v544, %v571
        %v581 = vadd.f32 %v545, %v571
        %v582 = vadd.f32 %v546, %v571
        %v583 = vadd.f32 %v547, %v571
        %v584 = vadd.f32 %v548, %v571
        %v585 = vadd.f32 %v549, %v571
        %v586 = vadd.f32 %v550, %v571
        %v587 = vadd.f32 %v551, %v571
        %v588 = vadd.f32 %v552, %v571
        %v589 = vadd.f32 %v553, %v571
        %v590 = vadd.f32 %v554, %v571
        %v591 = vadd.f32 %v555, %v571
        %v592 = vadd.f32 %v556, %v571
        %v593 = vadd.f32 %v557, %v571
        %v594 = vadd.f32 %v558, %v571
        %v595 = vadd.f32 %v559, %v571
        %v596 = vadd.f32 %v560, %v571
        %v597 = vadd.f32 %v561, %v571
        %v598 = vadd.f32 %v562, %v571
        %v599 = vadd.f32 %v563, %v571
        %v600 = vadd.f32 %v564, %v571
        %v601 = vadd.f32 %v565, %v571
        %v602 = vadd.f32 %v566, %v571
        %v603 = vadd.f32 %v567, %v571
        %v604 = vadd.f32 %v568, %v571
        %v605 = vmax.f32 %v573, 0.0
        %v606 = vmax.f32 %v574, 0.0
        %v607 = vmax.f32 %v575, 0.0
        %v608 = vmax.f32 %v576, 0.0
        %v609 = vmax.f32 %v577, 0.0
        %v610 = vmax.f32 %v578, 0.0
        %v611 = vmax.f32 %v579, 0.0
        %v612 = vmax.f32 %v580, 0.0
        %v613 = vmax.f32 %v581, 0.0
        %v614 = vmax.f32 %v582, 0.0
        %v615 = vmax.f32 %v583, 0.0
        %v616 = vmax.f32 %v584, 0.0
        %v617 = vmax.f32 %v585, 0.0
        %v618 = vmax.f32 %v586, 0.0
        %v619 = vmax.f32 %v587, 0.0
        %v620 = vmax.f32 %v588, 0.0
        %v621 = vmax.f32 %v589, 0.0
        %v622 = vmax.f32 %v590, 0.0
        %v623 = vmax.f32 %v591, 0.0
        %v624 = vmax.f32 %v592, 0.0
        %v625 = vmax.f32 %v593, 0.0
        %v626 = vmax.f32 %v594, 0.0
        %v627 = vmax.f32 %v595, 0.0
        %v628 = vmax.f32 %v596, 0.0
        %v629 = vmax.f32 %v597, 0.0
        %v630 = vmax.f32 %v598, 0.0
        %v631 = vmax.f32 %v599, 0.0
        %v632 = vmax.f32 %v600, 0.0
        %v633 = vmax.f32 %v601, 0.0
        %v634 = vmax.f32 %v602, 0.0
        %v635 = vmax.f32 %v603, 0.0
        %v636 = vmax.f32 %v604, 0.0
        %637 = vst [vmem:[%s339 + $0x1] sm:$0xff] %v605
        %638 = vst [vmem:[%s339 + $0x9] sm:$0xff] %v606
        %639 = vst [vmem:[%s339 + $0x19] sm:$0xff] %v607
        %640 = vst [vmem:[%s339 + $0x21] sm:$0xff] %v608
        %641 = vst [vmem:[%s339 + $0x31] sm:$0xff] %v609
        %642 = vst [vmem:[%s339 + $0x39] sm:$0xff] %v610
        %643 = vst [vmem:[%s339 + $0x49] sm:$0xff] %v611
        %644 = vst [vmem:[%s339 + $0x51] sm:$0xff] %v612
        %645 = vst [vmem:[%s339 + $0x61] sm:$0xff] %v613
        %646 = vst [vmem:[%s339 + $0x69] sm:$0xff] %v614
        %647 = vst [vmem:[%s339 + $0x79] sm:$0xff] %v615
        %648 = vst [vmem:[%s339 + $0x81] sm:$0xff] %v616
        %649 = vst [vmem:[%s339 + $0x91] sm:$0xff] %v617
        %650 = vst [vmem:[%s339 + $0x99] sm:$0xff] %v618
        %651 = vst [vmem:[%s339 + $0xa9] sm:$0xff] %v619
        %652 = vst [vmem:[%s339 + $0xb1] sm:$0xff] %v620
        %653 = vst [vmem:[%s339 + $0xc1] sm:$0xff] %v621
        %654 = vst [vmem:[%s339 + $0xc9] sm:$0xff] %v622
        %655 = vst [vmem:[%s339 + $0xd9] sm:$0xff] %v623
        %656 = vst [vmem:[%s339 + $0xe1] sm:$0xff] %v624
        %657 = vst [vmem:[%s339 + $0xf1] sm:$0xff] %v625
        %658 = vst [vmem:[%s339 + $0xf9] sm:$0xff] %v626
        %659 = vst [vmem:[%s339 + $0x109] sm:$0xff] %v627
        %660 = vst [vmem:[%s339 + $0x111] sm:$0xff] %v628
        %661 = vst [vmem:[%s339 + $0x121] sm:$0xff] %v629
        %662 = vst [vmem:[%s339 + $0x129] sm:$0xff] %v630
        %663 = vst [vmem:[%s339 + $0x139] sm:$0xff] %v631
        %664 = vst [vmem:[%s339 + $0x141] sm:$0xff] %v632
        %665 = vst [vmem:[%s339 + $0x151] sm:$0xff] %v633
        %666 = vst [vmem:[%s339 + $0x159] sm:$0xff] %v634
        %667 = vst [vmem:[%s339 + $0x169] sm:$0xff] %v635
        %668 = vst [vmem:[%s339 + $0x171] sm:$0xff] %v636
        %v669 = vld [vmem:[#allocation2] sm:$0xff]
        %v670 = vld [vmem:[#allocation2 + $0x8] sm:$0xff]
        %v671 = vld [vmem:[#allocation2 + $0x18] sm:$0xff]
        %v672 = vld [vmem:[#allocation2 + $0x20] sm:$0xff]
        %v673 = vld [vmem:[#allocation2 + $0x30] sm:$0xff]
        %v674 = vld [vmem:[#allocation2 + $0x38] sm:$0xff]
        %v675 = vld [vmem:[#allocation2 + $0x48] sm:$0xff]
        %v676 = vld [vmem:[#allocation2 + $0x50] sm:$0xff]
        %v677 = vld [vmem:[#allocation2 + $0x60] sm:$0xff]
        %v678 = vld [vmem:[#allocation2 + $0x68] sm:$0xff]
        %v679 = vld [vmem:[#allocation2 + $0x78] sm:$0xff]
        %v680 = vld [vmem:[#allocation2 + $0x80] sm:$0xff]
        %v681 = vld [vmem:[#allocation2 + $0x90] sm:$0xff]
        %v682 = vld [vmem:[#allocation2 + $0x98] sm:$0xff]
        %v683 = vld [vmem:[#allocation2 + $0xa8] sm:$0xff]
        %v684 = vld [vmem:[#allocation2 + $0xb0] sm:$0xff]
        %v685 = vld [vmem:[#allocation2 + $0xc0] sm:$0xff]
        %v686 = vld [vmem:[#allocation2 + $0xc8] sm:$0xff]
        %v687 = vld [vmem:[#allocation2 + $0xd8] sm:$0xff]
        %v688 = vld [vmem:[#allocation2 + $0xe0] sm:$0xff]
        %v689 = vld [vmem:[#allocation2 + $0xf0] sm:$0xff]
        %v690 = vld [vmem:[#allocation2 + $0xf8] sm:$0xff]
        %v691 = vld [vmem:[#allocation2 + $0x108] sm:$0xff]
        %v692 = vld [vmem:[#allocation2 + $0x110] sm:$0xff]
        %v693 = vld [vmem:[#allocation2 + $0x120] sm:$0xff]
        %v694 = vld [vmem:[#allocation2 + $0x128] sm:$0xff]
        %v695 = vld [vmem:[#allocation2 + $0x138] sm:$0xff]
        %v696 = vld [vmem:[#allocation2 + $0x140] sm:$0xff]
        %v697 = vld [vmem:[#allocation2 + $0x150] sm:$0xff]
        %v698 = vld [vmem:[#allocation2 + $0x158] sm:$0xff]
        %v699 = vld [vmem:[#allocation2 + $0x168] sm:$0xff]
        %v700 = vld [vmem:[#allocation2 + $0x170] sm:$0xff]
        %v701 = vld [vmem:[#allocation8] sm:$0xff]
        %v702 = vld [vmem:[#allocation8 + $0x8] sm:$0xff]
        %v703 = vld [vmem:[#allocation8 + $0x10] sm:$0xff]
        %v704 = vld [vmem:[#allocation8 + $0x18] sm:$0xff]
        %v705 = vld [vmem:[#allocation8 + $0x20] sm:$0xff]
        %v706 = vld [vmem:[#allocation8 + $0x28] sm:$0xff]
        %v707 = vld [vmem:[#allocation8 + $0x30] sm:$0xff]
        %v708 = vld [vmem:[#allocation8 + $0x38] sm:$0xff]
        %v709 = vld [vmem:[#allocation8 + $0x40] sm:$0xff]
        %v710 = vld [vmem:[#allocation8 + $0x48] sm:$0xff]
        %v711 = vld [vmem:[#allocation8 + $0x50] sm:$0xff]
        %v712 = vld [vmem:[#allocation8 + $0x58] sm:$0xff]
        %v713 = vld [vmem:[#allocation8 + $0x60] sm:$0xff]
        %v714 = vld [vmem:[#allocation8 + $0x68] sm:$0xff]
        %v715 = vld [vmem:[#allocation8 + $0x70] sm:$0xff]
        %v716 = vld [vmem:[#allocation8 + $0x78] sm:$0xff]
        %v717 = vld [vmem:[#allocation2 + $0x1] sm:$0xff]
        %v718 = vld [vmem:[#allocation2 + $0x9] sm:$0xff]
        %v719 = vld [vmem:[#allocation2 + $0x19] sm:$0xff]
        %v720 = vld [vmem:[#allocation2 + $0x21] sm:$0xff]
        %v721 = vld [vmem:[#allocation2 + $0x31] sm:$0xff]
        %v722 = vld [vmem:[#allocation2 + $0x39] sm:$0xff]
        %v723 = vld [vmem:[#allocation2 + $0x49] sm:$0xff]
        %v724 = vld [vmem:[#allocation2 + $0x51] sm:$0xff]
        %v725 = vld [vmem:[#allocation2 + $0x61] sm:$0xff]
        %v726 = vld [vmem:[#allocation2 + $0x69] sm:$0xff]
        %v727 = vld [vmem:[#allocation2 + $0x79] sm:$0xff]
        %v728 = vld [vmem:[#allocation2 + $0x81] sm:$0xff]
        %v729 = vld [vmem:[#allocation2 + $0x91] sm:$0xff]
        %v730 = vld [vmem:[#allocation2 + $0x99] sm:$0xff]
        %v731 = vld [vmem:[#allocation2 + $0xa9] sm:$0xff]
        %v732 = vld [vmem:[#allocation2 + $0xb1] sm:$0xff]
        %v733 = vld [vmem:[#allocation2 + $0xc1] sm:$0xff]
        %v734 = vld [vmem:[#allocation2 + $0xc9] sm:$0xff]
        %v735 = vld [vmem:[#allocation2 + $0xd9] sm:$0xff]
        %v736 = vld [vmem:[#allocation2 + $0xe1] sm:$0xff]
        %v737 = vld [vmem:[#allocation2 + $0xf1] sm:$0xff]
        %v738 = vld [vmem:[#allocation2 + $0xf9] sm:$0xff]
        %v739 = vld [vmem:[#allocation2 + $0x109] sm:$0xff]
        %v740 = vld [vmem:[#allocation2 + $0x111] sm:$0xff]
        %v741 = vld [vmem:[#allocation2 + $0x121] sm:$0xff]
        %v742 = vld [vmem:[#allocation2 + $0x129] sm:$0xff]
        %v743 = vld [vmem:[#allocation2 + $0x139] sm:$0xff]
        %v744 = vld [vmem:[#allocation2 + $0x141] sm:$0xff]
        %v745 = vld [vmem:[#allocation2 + $0x151] sm:$0xff]
        %v746 = vld [vmem:[#allocation2 + $0x159] sm:$0xff]
        %v747 = vld [vmem:[#allocation2 + $0x169] sm:$0xff]
        %v748 = vld [vmem:[#allocation2 + $0x171] sm:$0xff]
        %s749 = scalar_lea.vmem [#allocation8], 128
        %v750 = vld [vmem:[%s749] sm:$0xff]
        %v751 = vld [vmem:[%s749 + $0x8] sm:$0xff]
        %v752 = vld [vmem:[%s749 + $0x10] sm:$0xff]
        %v753 = vld [vmem:[%s749 + $0x18] sm:$0xff]
        %v754 = vld [vmem:[%s749 + $0x20] sm:$0xff]
        %v755 = vld [vmem:[%s749 + $0x28] sm:$0xff]
        %v756 = vld [vmem:[%s749 + $0x30] sm:$0xff]
        %v757 = vld [vmem:[%s749 + $0x38] sm:$0xff]
        %v758 = vld [vmem:[%s749 + $0x40] sm:$0xff]
        %v759 = vld [vmem:[%s749 + $0x48] sm:$0xff]
        %v760 = vld [vmem:[%s749 + $0x50] sm:$0xff]
        %v761 = vld [vmem:[%s749 + $0x58] sm:$0xff]
        %v762 = vld [vmem:[%s749 + $0x60] sm:$0xff]
        %v763 = vld [vmem:[%s749 + $0x68] sm:$0xff]
        %v764 = vld [vmem:[%s749 + $0x70] sm:$0xff]
        %v765 = vld [vmem:[%s749 + $0x78] sm:$0xff]
        %766 = vmatpush.msra.mxu0 %v765
        %767 = vmatpush.msra.mxu0 %v764
        %768 = vmatpush.msra.mxu0 %v763
        %769 = vmatpush.msra.mxu0 %v762
        %770 = vmatpush.msra.mxu0 %v761
        %771 = vmatpush.msra.mxu0 %v760
        %772 = vmatpush.msra.mxu0 %v759
        %773 = vmatpush.msra.mxu0 %v758
        %774 = vmatpush.msra.mxu0 %v757
        %775 = vmatpush.msra.mxu0 %v756
        %776 = vmatpush.msra.mxu0 %v755
        %777 = vmatpush.msra.mxu0 %v754
        %778 = vmatpush.msra.mxu0 %v753
        %779 = vmatpush.msra.mxu0 %v752
        %780 = vmatpush.msra.mxu0 %v751
        %781 = vmatpush.msra.mxu0 %v750
        %782 = vmatmul.f32.gmra.mxu0 %v717
        %v783 = vpop.f32.mrf.mxu0
        %v784 = vadd.f32 0.0, %v783
        %785 = vmatmul.f32.gmra.mxu0 %v718
        %v786 = vpop.f32.mrf.mxu0
        %v787 = vadd.f32 0.0, %v786
        %788 = vmatmul.f32.gmra.mxu0 %v719
        %v789 = vpop.f32.mrf.mxu0
        %v790 = vadd.f32 0.0, %v789
        %791 = vmatmul.f32.gmra.mxu0 %v720
        %v792 = vpop.f32.mrf.mxu0
        %v793 = vadd.f32 0.0, %v792
        %794 = vmatmul.f32.gmra.mxu0 %v721
        %v795 = vpop.f32.mrf.mxu0
        %v796 = vadd.f32 0.0, %v795
        %797 = vmatmul.f32.gmra.mxu0 %v722
        %v798 = vpop.f32.mrf.mxu0
        %v799 = vadd.f32 0.0, %v798
        %800 = vmatmul.f32.gmra.mxu0 %v723
        %v801 = vpop.f32.mrf.mxu0
        %v802 = vadd.f32 0.0, %v801
        %803 = vmatmul.f32.gmra.mxu0 %v724
        %v804 = vpop.f32.mrf.mxu0
        %v805 = vadd.f32 0.0, %v804
        %806 = vmatmul.f32.gmra.mxu0 %v725
        %v807 = vpop.f32.mrf.mxu0
        %v808 = vadd.f32 0.0, %v807
        %809 = vmatmul.f32.gmra.mxu0 %v726
        %v810 = vpop.f32.mrf.mxu0
        %v811 = vadd.f32 0.0, %v810
        %812 = vmatmul.f32.gmra.mxu0 %v727
        %v813 = vpop.f32.mrf.mxu0
        %v814 = vadd.f32 0.0, %v813
        %815 = vmatmul.f32.gmra.mxu0 %v728
        %v816 = vpop.f32.mrf.mxu0
        %v817 = vadd.f32 0.0, %v816
        %818 = vmatmul.f32.gmra.mxu0 %v729
        %v819 = vpop.f32.mrf.mxu0
        %v820 = vadd.f32 0.0, %v819
        %821 = vmatmul.f32.gmra.mxu0 %v730
        %v822 = vpop.f32.mrf.mxu0
        %v823 = vadd.f32 0.0, %v822
        %824 = vmatmul.f32.gmra.mxu0 %v731
        %v825 = vpop.f32.mrf.mxu0
        %v826 = vadd.f32 0.0, %v825
        %827 = vmatmul.f32.gmra.mxu0 %v732
        %v828 = vpop.f32.mrf.mxu0
        %v829 = vadd.f32 0.0, %v828
        %830 = vmatmul.f32.gmra.mxu0 %v733
        %v831 = vpop.f32.mrf.mxu0
        %v832 = vadd.f32 0.0, %v831
        %833 = vmatmul.f32.gmra.mxu0 %v734
        %v834 = vpop.f32.mrf.mxu0
        %v835 = vadd.f32 0.0, %v834
        %836 = vmatmul.f32.gmra.mxu0 %v735
        %v837 = vpop.f32.mrf.mxu0
        %v838 = vadd.f32 0.0, %v837
        %839 = vmatmul.f32.gmra.mxu0 %v736
        %v840 = vpop.f32.mrf.mxu0
        %v841 = vadd.f32 0.0, %v840
        %842 = vmatmul.f32.gmra.mxu0 %v737
        %v843 = vpop.f32.mrf.mxu0
        %v844 = vadd.f32 0.0, %v843
        %845 = vmatmul.f32.gmra.mxu0 %v738
        %v846 = vpop.f32.mrf.mxu0
        %v847 = vadd.f32 0.0, %v846
        %848 = vmatmul.f32.gmra.mxu0 %v739
        %v849 = vpop.f32.mrf.mxu0
        %v850 = vadd.f32 0.0, %v849
        %851 = vmatmul.f32.gmra.mxu0 %v740
        %v852 = vpop.f32.mrf.mxu0
        %v853 = vadd.f32 0.0, %v852
        %854 = vmatmul.f32.gmra.mxu0 %v741
        %v855 = vpop.f32.mrf.mxu0
        %v856 = vadd.f32 0.0, %v855
        %857 = vmatmul.f32.gmra.mxu0 %v742
        %v858 = vpop.f32.mrf.mxu0
        %v859 = vadd.f32 0.0, %v858
        %860 = vmatmul.f32.gmra.mxu0 %v743
        %v861 = vpop.f32.mrf.mxu0
        %v862 = vadd.f32 0.0, %v861
        %863 = vmatmul.f32.gmra.mxu0 %v744
        %v864 = vpop.f32.mrf.mxu0
        %v865 = vadd.f32 0.0, %v864
        %866 = vmatmul.f32.gmra.mxu0 %v745
        %v867 = vpop.f32.mrf.mxu0
        %v868 = vadd.f32 0.0, %v867
        %869 = vmatmul.f32.gmra.mxu0 %v746
        %v870 = vpop.f32.mrf.mxu0
        %v871 = vadd.f32 0.0, %v870
        %872 = vmatmul.f32.gmra.mxu0 %v747
        %v873 = vpop.f32.mrf.mxu0
        %v874 = vadd.f32 0.0, %v873
        %875 = vmatmul.f32.gmra.mxu0 %v748
        %v876 = vpop.f32.mrf.mxu0
        %v877 = vadd.f32 0.0, %v876
        %878 = vdwg.mxu0
        %879 = vmatpush.msra.mxu0 %v716
        %880 = vmatpush.msra.mxu0 %v715
        %881 = vmatpush.msra.mxu0 %v714
        %882 = vmatpush.msra.mxu0 %v713
        %883 = vmatpush.msra.mxu0 %v712
        %884 = vmatpush.msra.mxu0 %v711
        %885 = vmatpush.msra.mxu0 %v710
        %886 = vmatpush.msra.mxu0 %v709
        %887 = vmatpush.msra.mxu0 %v708
        %888 = vmatpush.msra.mxu0 %v707
        %889 = vmatpush.msra.mxu0 %v706
        %890 = vmatpush.msra.mxu0 %v705
        %891 = vmatpush.msra.mxu0 %v704
        %892 = vmatpush.msra.mxu0 %v703
        %893 = vmatpush.msra.mxu0 %v702
        %894 = vmatpush.msra.mxu0 %v701
        %895 = vmatmul.f32.gmra.mxu0 %v669
        %v896 = vpop.f32.mrf.mxu0
        %v897 = vadd.f32 %v784, %v896
        %898 = vmatmul.f32.gmra.mxu0 %v670
        %v899 = vpop.f32.mrf.mxu0
        %v900 = vadd.f32 %v787, %v899
        %901 = vmatmul.f32.gmra.mxu0 %v671
        %v902 = vpop.f32.mrf.mxu0
        %v903 = vadd.f32 %v790, %v902
        %904 = vmatmul.f32.gmra.mxu0 %v672
        %v905 = vpop.f32.mrf.mxu0
        %v906 = vadd.f32 %v793, %v905
        %907 = vmatmul.f32.gmra.mxu0 %v673
        %v908 = vpop.f32.mrf.mxu0
        %v909 = vadd.f32 %v796, %v908
        %910 = vmatmul.f32.gmra.mxu0 %v674
        %v911 = vpop.f32.mrf.mxu0
        %v912 = vadd.f32 %v799, %v911
        %913 = vmatmul.f32.gmra.mxu0 %v675
        %v914 = vpop.f32.mrf.mxu0
        %v915 = vadd.f32 %v802, %v914
        %916 = vmatmul.f32.gmra.mxu0 %v676
        %v917 = vpop.f32.mrf.mxu0
        %v918 = vadd.f32 %v805, %v917
        %919 = vmatmul.f32.gmra.mxu0 %v677
        %v920 = vpop.f32.mrf.mxu0
        %v921 = vadd.f32 %v808, %v920
        %922 = vmatmul.f32.gmra.mxu0 %v678
        %v923 = vpop.f32.mrf.mxu0
        %v924 = vadd.f32 %v811, %v923
        %925 = vmatmul.f32.gmra.mxu0 %v679
        %v926 = vpop.f32.mrf.mxu0
        %v927 = vadd.f32 %v814, %v926
        %928 = vmatmul.f32.gmra.mxu0 %v680
        %v929 = vpop.f32.mrf.mxu0
        %v930 = vadd.f32 %v817, %v929
        %931 = vmatmul.f32.gmra.mxu0 %v681
        %v932 = vpop.f32.mrf.mxu0
        %v933 = vadd.f32 %v820, %v932
        %934 = vmatmul.f32.gmra.mxu0 %v682
        %v935 = vpop.f32.mrf.mxu0
        %v936 = vadd.f32 %v823, %v935
        %937 = vmatmul.f32.gmra.mxu0 %v683
        %v938 = vpop.f32.mrf.mxu0
        %v939 = vadd.f32 %v826, %v938
        %940 = vmatmul.f32.gmra.mxu0 %v684
        %v941 = vpop.f32.mrf.mxu0
        %v942 = vadd.f32 %v829, %v941
        %943 = vmatmul.f32.gmra.mxu0 %v685
        %v944 = vpop.f32.mrf.mxu0
        %v945 = vadd.f32 %v832, %v944
        %946 = vmatmul.f32.gmra.mxu0 %v686
        %v947 = vpop.f32.mrf.mxu0
        %v948 = vadd.f32 %v835, %v947
        %949 = vmatmul.f32.gmra.mxu0 %v687
        %v950 = vpop.f32.mrf.mxu0
        %v951 = vadd.f32 %v838, %v950
        %952 = vmatmul.f32.gmra.mxu0 %v688
        %v953 = vpop.f32.mrf.mxu0
        %v954 = vadd.f32 %v841, %v953
        %955 = vmatmul.f32.gmra.mxu0 %v689
        %v956 = vpop.f32.mrf.mxu0
        %v957 = vadd.f32 %v844, %v956
        %958 = vmatmul.f32.gmra.mxu0 %v690
        %v959 = vpop.f32.mrf.mxu0
        %v960 = vadd.f32 %v847, %v959
        %961 = vmatmul.f32.gmra.mxu0 %v691
        %v962 = vpop.f32.mrf.mxu0
        %v963 = vadd.f32 %v850, %v962
        %964 = vmatmul.f32.gmra.mxu0 %v692
        %v965 = vpop.f32.mrf.mxu0
        %v966 = vadd.f32 %v853, %v965
        %967 = vmatmul.f32.gmra.mxu0 %v693
        %v968 = vpop.f32.mrf.mxu0
        %v969 = vadd.f32 %v856, %v968
        %970 = vmatmul.f32.gmra.mxu0 %v694
        %v971 = vpop.f32.mrf.mxu0
        %v972 = vadd.f32 %v859, %v971
        %973 = vmatmul.f32.gmra.mxu0 %v695
        %v974 = vpop.f32.mrf.mxu0
        %v975 = vadd.f32 %v862, %v974
        %976 = vmatmul.f32.gmra.mxu0 %v696
        %v977 = vpop.f32.mrf.mxu0
        %v978 = vadd.f32 %v865, %v977
        %979 = vmatmul.f32.gmra.mxu0 %v697
        %v980 = vpop.f32.mrf.mxu0
        %v981 = vadd.f32 %v868, %v980
        %982 = vmatmul.f32.gmra.mxu0 %v698
        %v983 = vpop.f32.mrf.mxu0
        %v984 = vadd.f32 %v871, %v983
        %985 = vmatmul.f32.gmra.mxu0 %v699
        %v986 = vpop.f32.mrf.mxu0
        %v987 = vadd.f32 %v874, %v986
        %988 = vmatmul.f32.gmra.mxu0 %v700
        %v989 = vpop.f32.mrf.mxu0
        %v990 = vadd.f32 %v877, %v989
        %991 = vdwg.mxu0
        %v992 = vld [vmem:[#allocation2 + $0x2] sm:$0xff]
        %v993 = vld [vmem:[#allocation2 + $0xa] sm:$0xff]
        %v994 = vld [vmem:[#allocation2 + $0x1a] sm:$0xff]
        %v995 = vld [vmem:[#allocation2 + $0x22] sm:$0xff]
        %v996 = vld [vmem:[#allocation2 + $0x32] sm:$0xff]
        %v997 = vld [vmem:[#allocation2 + $0x3a] sm:$0xff]
        %v998 = vld [vmem:[#allocation2 + $0x4a] sm:$0xff]
        %v999 = vld [vmem:[#allocation2 + $0x52] sm:$0xff]
        %v1000 = vld [vmem:[#allocation2 + $0x62] sm:$0xff]
        %v1001 = vld [vmem:[#allocation2 + $0x6a] sm:$0xff]
        %v1002 = vld [vmem:[#allocation2 + $0x7a] sm:$0xff]
        %v1003 = vld [vmem:[#allocation2 + $0x82] sm:$0xff]
        %v1004 = vld [vmem:[#allocation2 + $0x92] sm:$0xff]
        %v1005 = vld [vmem:[#allocation2 + $0x9a] sm:$0xff]
        %v1006 = vld [vmem:[#allocation2 + $0xaa] sm:$0xff]
        %v1007 = vld [vmem:[#allocation2 + $0xb2] sm:$0xff]
        %v1008 = vld [vmem:[#allocation2 + $0xc2] sm:$0xff]
        %v1009 = vld [vmem:[#allocation2 + $0xca] sm:$0xff]
        %v1010 = vld [vmem:[#allocation2 + $0xda] sm:$0xff]
        %v1011 = vld [vmem:[#allocation2 + $0xe2] sm:$0xff]
        %v1012 = vld [vmem:[#allocation2 + $0xf2] sm:$0xff]
        %v1013 = vld [vmem:[#allocation2 + $0xfa] sm:$0xff]
        %v1014 = vld [vmem:[#allocation2 + $0x10a] sm:$0xff]
        %v1015 = vld [vmem:[#allocation2 + $0x112] sm:$0xff]
        %v1016 = vld [vmem:[#allocation2 + $0x122] sm:$0xff]
        %v1017 = vld [vmem:[#allocation2 + $0x12a] sm:$0xff]
        %v1018 = vld [vmem:[#allocation2 + $0x13a] sm:$0xff]
        %v1019 = vld [vmem:[#allocation2 + $0x142] sm:$0xff]
        %v1020 = vld [vmem:[#allocation2 + $0x152] sm:$0xff]
        %v1021 = vld [vmem:[#allocation2 + $0x15a] sm:$0xff]
        %v1022 = vld [vmem:[#allocation2 + $0x16a] sm:$0xff]
        %v1023 = vld [vmem:[#allocation2 + $0x172] sm:$0xff]
        %s1024 = scalar_lea.vmem [#allocation8], 256
        %v1025 = vld [vmem:[%s1024] sm:$0xff]
        %v1026 = vld [vmem:[%s1024 + $0x8] sm:$0xff]
        %v1027 = vld [vmem:[%s1024 + $0x10] sm:$0xff]
        %v1028 = vld [vmem:[%s1024 + $0x18] sm:$0xff]
        %v1029 = vld [vmem:[%s1024 + $0x20] sm:$0xff]
        %v1030 = vld [vmem:[%s1024 + $0x28] sm:$0xff]
        %v1031 = vld [vmem:[%s1024 + $0x30] sm:$0xff]
        %v1032 = vld [vmem:[%s1024 + $0x38] sm:$0xff]
        %v1033 = vld [vmem:[%s1024 + $0x40] sm:$0xff]
        %v1034 = vld [vmem:[%s1024 + $0x48] sm:$0xff]
        %v1035 = vld [vmem:[%s1024 + $0x50] sm:$0xff]
        %v1036 = vld [vmem:[%s1024 + $0x58] sm:$0xff]
        %v1037 = vld [vmem:[%s1024 + $0x60] sm:$0xff]
        %v1038 = vld [vmem:[%s1024 + $0x68] sm:$0xff]
        %v1039 = vld [vmem:[%s1024 + $0x70] sm:$0xff]
        %v1040 = vld [vmem:[%s1024 + $0x78] sm:$0xff]
        %1041 = vmatpush.msra.mxu0 %v1040
        %1042 = vmatpush.msra.mxu0 %v1039
        %1043 = vmatpush.msra.mxu0 %v1038
        %1044 = vmatpush.msra.mxu0 %v1037
        %1045 = vmatpush.msra.mxu0 %v1036
        %1046 = vmatpush.msra.mxu0 %v1035
        %1047 = vmatpush.msra.mxu0 %v1034
        %1048 = vmatpush.msra.mxu0 %v1033
        %1049 = vmatpush.msra.mxu0 %v1032
        %1050 = vmatpush.msra.mxu0 %v1031
        %1051 = vmatpush.msra.mxu0 %v1030
        %1052 = vmatpush.msra.mxu0 %v1029
        %1053 = vmatpush.msra.mxu0 %v1028
        %1054 = vmatpush.msra.mxu0 %v1027
        %1055 = vmatpush.msra.mxu0 %v1026
        %1056 = vmatpush.msra.mxu0 %v1025
        %1057 = vmatmul.f32.gmra.mxu0 %v992
        %v1058 = vpop.f32.mrf.mxu0
        %v1059 = vadd.f32 0.0, %v1058
        %1060 = vmatmul.f32.gmra.mxu0 %v993
        %v1061 = vpop.f32.mrf.mxu0
        %v1062 = vadd.f32 0.0, %v1061
        %1063 = vmatmul.f32.gmra.mxu0 %v994
        %v1064 = vpop.f32.mrf.mxu0
        %v1065 = vadd.f32 0.0, %v1064
        %1066 = vmatmul.f32.gmra.mxu0 %v995
        %v1067 = vpop.f32.mrf.mxu0
        %v1068 = vadd.f32 0.0, %v1067
        %1069 = vmatmul.f32.gmra.mxu0 %v996
        %v1070 = vpop.f32.mrf.mxu0
        %v1071 = vadd.f32 0.0, %v1070
        %1072 = vmatmul.f32.gmra.mxu0 %v997
        %v1073 = vpop.f32.mrf.mxu0
        %v1074 = vadd.f32 0.0, %v1073
        %1075 = vmatmul.f32.gmra.mxu0 %v998
        %v1076 = vpop.f32.mrf.mxu0
        %v1077 = vadd.f32 0.0, %v1076
        %1078 = vmatmul.f32.gmra.mxu0 %v999
        %v1079 = vpop.f32.mrf.mxu0
        %v1080 = vadd.f32 0.0, %v1079
        %1081 = vmatmul.f32.gmra.mxu0 %v1000
        %v1082 = vpop.f32.mrf.mxu0
        %v1083 = vadd.f32 0.0, %v1082
        %1084 = vmatmul.f32.gmra.mxu0 %v1001
        %v1085 = vpop.f32.mrf.mxu0
        %v1086 = vadd.f32 0.0, %v1085
        %1087 = vmatmul.f32.gmra.mxu0 %v1002
        %v1088 = vpop.f32.mrf.mxu0
        %v1089 = vadd.f32 0.0, %v1088
        %1090 = vmatmul.f32.gmra.mxu0 %v1003
        %v1091 = vpop.f32.mrf.mxu0
        %v1092 = vadd.f32 0.0, %v1091
        %1093 = vmatmul.f32.gmra.mxu0 %v1004
        %v1094 = vpop.f32.mrf.mxu0
        %v1095 = vadd.f32 0.0, %v1094
        %1096 = vmatmul.f32.gmra.mxu0 %v1005
        %v1097 = vpop.f32.mrf.mxu0
        %v1098 = vadd.f32 0.0, %v1097
        %1099 = vmatmul.f32.gmra.mxu0 %v1006
        %v1100 = vpop.f32.mrf.mxu0
        %v1101 = vadd.f32 0.0, %v1100
        %1102 = vmatmul.f32.gmra.mxu0 %v1007
        %v1103 = vpop.f32.mrf.mxu0
        %v1104 = vadd.f32 0.0, %v1103
        %1105 = vmatmul.f32.gmra.mxu0 %v1008
        %v1106 = vpop.f32.mrf.mxu0
        %v1107 = vadd.f32 0.0, %v1106
        %1108 = vmatmul.f32.gmra.mxu0 %v1009
        %v1109 = vpop.f32.mrf.mxu0
        %v1110 = vadd.f32 0.0, %v1109
        %1111 = vmatmul.f32.gmra.mxu0 %v1010
        %v1112 = vpop.f32.mrf.mxu0
        %v1113 = vadd.f32 0.0, %v1112
        %1114 = vmatmul.f32.gmra.mxu0 %v1011
        %v1115 = vpop.f32.mrf.mxu0
        %v1116 = vadd.f32 0.0, %v1115
        %1117 = vmatmul.f32.gmra.mxu0 %v1012
        %v1118 = vpop.f32.mrf.mxu0
        %v1119 = vadd.f32 0.0, %v1118
        %1120 = vmatmul.f32.gmra.mxu0 %v1013
        %v1121 = vpop.f32.mrf.mxu0
        %v1122 = vadd.f32 0.0, %v1121
        %1123 = vmatmul.f32.gmra.mxu0 %v1014
        %v1124 = vpop.f32.mrf.mxu0
        %v1125 = vadd.f32 0.0, %v1124
        %1126 = vmatmul.f32.gmra.mxu0 %v1015
        %v1127 = vpop.f32.mrf.mxu0
        %v1128 = vadd.f32 0.0, %v1127
        %1129 = vmatmul.f32.gmra.mxu0 %v1016
        %v1130 = vpop.f32.mrf.mxu0
        %v1131 = vadd.f32 0.0, %v1130
        %1132 = vmatmul.f32.gmra.mxu0 %v1017
        %v1133 = vpop.f32.mrf.mxu0
        %v1134 = vadd.f32 0.0, %v1133
        %1135 = vmatmul.f32.gmra.mxu0 %v1018
        %v1136 = vpop.f32.mrf.mxu0
        %v1137 = vadd.f32 0.0, %v1136
        %1138 = vmatmul.f32.gmra.mxu0 %v1019
        %v1139 = vpop.f32.mrf.mxu0
        %v1140 = vadd.f32 0.0, %v1139
        %1141 = vmatmul.f32.gmra.mxu0 %v1020
        %v1142 = vpop.f32.mrf.mxu0
        %v1143 = vadd.f32 0.0, %v1142
        %1144 = vmatmul.f32.gmra.mxu0 %v1021
        %v1145 = vpop.f32.mrf.mxu0
        %v1146 = vadd.f32 0.0, %v1145
        %1147 = vmatmul.f32.gmra.mxu0 %v1022
        %v1148 = vpop.f32.mrf.mxu0
        %v1149 = vadd.f32 0.0, %v1148
        %1150 = vmatmul.f32.gmra.mxu0 %v1023
        %v1151 = vpop.f32.mrf.mxu0
        %v1152 = vadd.f32 0.0, %v1151
        %1153 = vdwg.mxu0
        %v1154 = vadd.f32 %v897, %v1059
        %v1155 = vadd.f32 %v900, %v1062
        %v1156 = vadd.f32 %v903, %v1065
        %v1157 = vadd.f32 %v906, %v1068
        %v1158 = vadd.f32 %v909, %v1071
        %v1159 = vadd.f32 %v912, %v1074
        %v1160 = vadd.f32 %v915, %v1077
        %v1161 = vadd.f32 %v918, %v1080
        %v1162 = vadd.f32 %v921, %v1083
        %v1163 = vadd.f32 %v924, %v1086
        %v1164 = vadd.f32 %v927, %v1089
        %v1165 = vadd.f32 %v930, %v1092
        %v1166 = vadd.f32 %v933, %v1095
        %v1167 = vadd.f32 %v936, %v1098
        %v1168 = vadd.f32 %v939, %v1101
        %v1169 = vadd.f32 %v942, %v1104
        %v1170 = vadd.f32 %v945, %v1107
        %v1171 = vadd.f32 %v948, %v1110
        %v1172 = vadd.f32 %v951, %v1113
        %v1173 = vadd.f32 %v954, %v1116
        %v1174 = vadd.f32 %v957, %v1119
        %v1175 = vadd.f32 %v960, %v1122
        %v1176 = vadd.f32 %v963, %v1125
        %v1177 = vadd.f32 %v966, %v1128
        %v1178 = vadd.f32 %v969, %v1131
        %v1179 = vadd.f32 %v972, %v1134
        %v1180 = vadd.f32 %v975, %v1137
        %v1181 = vadd.f32 %v978, %v1140
        %v1182 = vadd.f32 %v981, %v1143
        %v1183 = vadd.f32 %v984, %v1146
        %v1184 = vadd.f32 %v987, %v1149
        %v1185 = vadd.f32 %v990, %v1152
        %v1186 = vld [vmem:[%s339] sm:$0xff]
        %v1187 = vld [vmem:[%s339 + $0x8] sm:$0xff]
        %v1188 = vld [vmem:[%s339 + $0x18] sm:$0xff]
        %v1189 = vld [vmem:[%s339 + $0x20] sm:$0xff]
        %v1190 = vld [vmem:[%s339 + $0x30] sm:$0xff]
        %v1191 = vld [vmem:[%s339 + $0x38] sm:$0xff]
        %v1192 = vld [vmem:[%s339 + $0x48] sm:$0xff]
        %v1193 = vld [vmem:[%s339 + $0x50] sm:$0xff]
        %v1194 = vld [vmem:[%s339 + $0x60] sm:$0xff]
        %v1195 = vld [vmem:[%s339 + $0x68] sm:$0xff]
        %v1196 = vld [vmem:[%s339 + $0x78] sm:$0xff]
        %v1197 = vld [vmem:[%s339 + $0x80] sm:$0xff]
        %v1198 = vld [vmem:[%s339 + $0x90] sm:$0xff]
        %v1199 = vld [vmem:[%s339 + $0x98] sm:$0xff]
        %v1200 = vld [vmem:[%s339 + $0xa8] sm:$0xff]
        %v1201 = vld [vmem:[%s339 + $0xb0] sm:$0xff]
        %v1202 = vld [vmem:[%s339 + $0xc0] sm:$0xff]
        %v1203 = vld [vmem:[%s339 + $0xc8] sm:$0xff]
        %v1204 = vld [vmem:[%s339 + $0xd8] sm:$0xff]
        %v1205 = vld [vmem:[%s339 + $0xe0] sm:$0xff]
        %v1206 = vld [vmem:[%s339 + $0xf0] sm:$0xff]
        %v1207 = vld [vmem:[%s339 + $0xf8] sm:$0xff]
        %v1208 = vld [vmem:[%s339 + $0x108] sm:$0xff]
        %v1209 = vld [vmem:[%s339 + $0x110] sm:$0xff]
        %v1210 = vld [vmem:[%s339 + $0x120] sm:$0xff]
        %v1211 = vld [vmem:[%s339 + $0x128] sm:$0xff]
        %v1212 = vld [vmem:[%s339 + $0x138] sm:$0xff]
        %v1213 = vld [vmem:[%s339 + $0x140] sm:$0xff]
        %v1214 = vld [vmem:[%s339 + $0x150] sm:$0xff]
        %v1215 = vld [vmem:[%s339 + $0x158] sm:$0xff]
        %v1216 = vld [vmem:[%s339 + $0x168] sm:$0xff]
        %v1217 = vld [vmem:[%s339 + $0x170] sm:$0xff]
        %s1218 = scalar_lea.vmem [#allocation8], 384
        %v1219 = vld [vmem:[%s1218] sm:$0xff]
        %v1220 = vld [vmem:[%s1218 + $0x8] sm:$0xff]
        %v1221 = vld [vmem:[%s1218 + $0x10] sm:$0xff]
        %v1222 = vld [vmem:[%s1218 + $0x18] sm:$0xff]
        %v1223 = vld [vmem:[%s1218 + $0x20] sm:$0xff]
        %v1224 = vld [vmem:[%s1218 + $0x28] sm:$0xff]
        %v1225 = vld [vmem:[%s1218 + $0x30] sm:$0xff]
        %v1226 = vld [vmem:[%s1218 + $0x38] sm:$0xff]
        %v1227 = vld [vmem:[%s1218 + $0x40] sm:$0xff]
        %v1228 = vld [vmem:[%s1218 + $0x48] sm:$0xff]
        %v1229 = vld [vmem:[%s1218 + $0x50] sm:$0xff]
        %v1230 = vld [vmem:[%s1218 + $0x58] sm:$0xff]
        %v1231 = vld [vmem:[%s1218 + $0x60] sm:$0xff]
        %v1232 = vld [vmem:[%s1218 + $0x68] sm:$0xff]
        %v1233 = vld [vmem:[%s1218 + $0x70] sm:$0xff]
        %v1234 = vld [vmem:[%s1218 + $0x78] sm:$0xff]
        %1235 = vmatpush.msra.mxu0 %v1234
        %1236 = vmatpush.msra.mxu0 %v1233
        %1237 = vmatpush.msra.mxu0 %v1232
        %1238 = vmatpush.msra.mxu0 %v1231
        %1239 = vmatpush.msra.mxu0 %v1230
        %1240 = vmatpush.msra.mxu0 %v1229
        %1241 = vmatpush.msra.mxu0 %v1228
        %1242 = vmatpush.msra.mxu0 %v1227
        %1243 = vmatpush.msra.mxu0 %v1226
        %1244 = vmatpush.msra.mxu0 %v1225
        %1245 = vmatpush.msra.mxu0 %v1224
        %1246 = vmatpush.msra.mxu0 %v1223
        %1247 = vmatpush.msra.mxu0 %v1222
        %1248 = vmatpush.msra.mxu0 %v1221
        %1249 = vmatpush.msra.mxu0 %v1220
        %1250 = vmatpush.msra.mxu0 %v1219
        %1251 = vmatmul.f32.gmra.mxu0 %v1186
        %v1252 = vpop.f32.mrf.mxu0
        %v1253 = vadd.f32 0.0, %v1252
        %1254 = vmatmul.f32.gmra.mxu0 %v1187
        %v1255 = vpop.f32.mrf.mxu0
        %v1256 = vadd.f32 0.0, %v1255
        %1257 = vmatmul.f32.gmra.mxu0 %v1188
        %v1258 = vpop.f32.mrf.mxu0
        %v1259 = vadd.f32 0.0, %v1258
        %1260 = vmatmul.f32.gmra.mxu0 %v1189
        %v1261 = vpop.f32.mrf.mxu0
        %v1262 = vadd.f32 0.0, %v1261
        %1263 = vmatmul.f32.gmra.mxu0 %v1190
        %v1264 = vpop.f32.mrf.mxu0
        %v1265 = vadd.f32 0.0, %v1264
        %1266 = vmatmul.f32.gmra.mxu0 %v1191
        %v1267 = vpop.f32.mrf.mxu0
        %v1268 = vadd.f32 0.0, %v1267
        %1269 = vmatmul.f32.gmra.mxu0 %v1192
        %v1270 = vpop.f32.mrf.mxu0
        %v1271 = vadd.f32 0.0, %v1270
        %1272 = vmatmul.f32.gmra.mxu0 %v1193
        %v1273 = vpop.f32.mrf.mxu0
        %v1274 = vadd.f32 0.0, %v1273
        %1275 = vmatmul.f32.gmra.mxu0 %v1194
        %v1276 = vpop.f32.mrf.mxu0
        %v1277 = vadd.f32 0.0, %v1276
        %1278 = vmatmul.f32.gmra.mxu0 %v1195
        %v1279 = vpop.f32.mrf.mxu0
        %v1280 = vadd.f32 0.0, %v1279
        %1281 = vmatmul.f32.gmra.mxu0 %v1196
        %v1282 = vpop.f32.mrf.mxu0
        %v1283 = vadd.f32 0.0, %v1282
        %1284 = vmatmul.f32.gmra.mxu0 %v1197
        %v1285 = vpop.f32.mrf.mxu0
        %v1286 = vadd.f32 0.0, %v1285
        %1287 = vmatmul.f32.gmra.mxu0 %v1198
        %v1288 = vpop.f32.mrf.mxu0
        %v1289 = vadd.f32 0.0, %v1288
        %1290 = vmatmul.f32.gmra.mxu0 %v1199
        %v1291 = vpop.f32.mrf.mxu0
        %v1292 = vadd.f32 0.0, %v1291
        %1293 = vmatmul.f32.gmra.mxu0 %v1200
        %v1294 = vpop.f32.mrf.mxu0
        %v1295 = vadd.f32 0.0, %v1294
        %1296 = vmatmul.f32.gmra.mxu0 %v1201
        %v1297 = vpop.f32.mrf.mxu0
        %v1298 = vadd.f32 0.0, %v1297
        %1299 = vmatmul.f32.gmra.mxu0 %v1202
        %v1300 = vpop.f32.mrf.mxu0
        %v1301 = vadd.f32 0.0, %v1300
        %1302 = vmatmul.f32.gmra.mxu0 %v1203
        %v1303 = vpop.f32.mrf.mxu0
        %v1304 = vadd.f32 0.0, %v1303
        %1305 = vmatmul.f32.gmra.mxu0 %v1204
        %v1306 = vpop.f32.mrf.mxu0
        %v1307 = vadd.f32 0.0, %v1306
        %1308 = vmatmul.f32.gmra.mxu0 %v1205
        %v1309 = vpop.f32.mrf.mxu0
        %v1310 = vadd.f32 0.0, %v1309
        %1311 = vmatmul.f32.gmra.mxu0 %v1206
        %v1312 = vpop.f32.mrf.mxu0
        %v1313 = vadd.f32 0.0, %v1312
        %1314 = vmatmul.f32.gmra.mxu0 %v1207
        %v1315 = vpop.f32.mrf.mxu0
        %v1316 = vadd.f32 0.0, %v1315
        %1317 = vmatmul.f32.gmra.mxu0 %v1208
        %v1318 = vpop.f32.mrf.mxu0
        %v1319 = vadd.f32 0.0, %v1318
        %1320 = vmatmul.f32.gmra.mxu0 %v1209
        %v1321 = vpop.f32.mrf.mxu0
        %v1322 = vadd.f32 0.0, %v1321
        %1323 = vmatmul.f32.gmra.mxu0 %v1210
        %v1324 = vpop.f32.mrf.mxu0
        %v1325 = vadd.f32 0.0, %v1324
        %1326 = vmatmul.f32.gmra.mxu0 %v1211
        %v1327 = vpop.f32.mrf.mxu0
        %v1328 = vadd.f32 0.0, %v1327
        %1329 = vmatmul.f32.gmra.mxu0 %v1212
        %v1330 = vpop.f32.mrf.mxu0
        %v1331 = vadd.f32 0.0, %v1330
        %1332 = vmatmul.f32.gmra.mxu0 %v1213
        %v1333 = vpop.f32.mrf.mxu0
        %v1334 = vadd.f32 0.0, %v1333
        %1335 = vmatmul.f32.gmra.mxu0 %v1214
        %v1336 = vpop.f32.mrf.mxu0
        %v1337 = vadd.f32 0.0, %v1336
        %1338 = vmatmul.f32.gmra.mxu0 %v1215
        %v1339 = vpop.f32.mrf.mxu0
        %v1340 = vadd.f32 0.0, %v1339
        %1341 = vmatmul.f32.gmra.mxu0 %v1216
        %v1342 = vpop.f32.mrf.mxu0
        %v1343 = vadd.f32 0.0, %v1342
        %1344 = vmatmul.f32.gmra.mxu0 %v1217
        %v1345 = vpop.f32.mrf.mxu0
        %v1346 = vadd.f32 0.0, %v1345
        %1347 = vdwg.mxu0
        %v1348 = vadd.f32 %v1154, %v1253
        %v1349 = vadd.f32 %v1155, %v1256
        %v1350 = vadd.f32 %v1156, %v1259
        %v1351 = vadd.f32 %v1157, %v1262
        %v1352 = vadd.f32 %v1158, %v1265
        %v1353 = vadd.f32 %v1159, %v1268
        %v1354 = vadd.f32 %v1160, %v1271
        %v1355 = vadd.f32 %v1161, %v1274
        %v1356 = vadd.f32 %v1162, %v1277
        %v1357 = vadd.f32 %v1163, %v1280
        %v1358 = vadd.f32 %v1164, %v1283
        %v1359 = vadd.f32 %v1165, %v1286
        %v1360 = vadd.f32 %v1166, %v1289
        %v1361 = vadd.f32 %v1167, %v1292
        %v1362 = vadd.f32 %v1168, %v1295
        %v1363 = vadd.f32 %v1169, %v1298
        %v1364 = vadd.f32 %v1170, %v1301
        %v1365 = vadd.f32 %v1171, %v1304
        %v1366 = vadd.f32 %v1172, %v1307
        %v1367 = vadd.f32 %v1173, %v1310
        %v1368 = vadd.f32 %v1174, %v1313
        %v1369 = vadd.f32 %v1175, %v1316
        %v1370 = vadd.f32 %v1176, %v1319
        %v1371 = vadd.f32 %v1177, %v1322
        %v1372 = vadd.f32 %v1178, %v1325
        %v1373 = vadd.f32 %v1179, %v1328
        %v1374 = vadd.f32 %v1180, %v1331
        %v1375 = vadd.f32 %v1181, %v1334
        %v1376 = vadd.f32 %v1182, %v1337
        %v1377 = vadd.f32 %v1183, %v1340
        %v1378 = vadd.f32 %v1184, %v1343
        %v1379 = vadd.f32 %v1185, %v1346
        %v1380 = vld [vmem:[%s339 + $0x1] sm:$0xff]
        %v1381 = vld [vmem:[%s339 + $0x9] sm:$0xff]
        %v1382 = vld [vmem:[%s339 + $0x19] sm:$0xff]
        %v1383 = vld [vmem:[%s339 + $0x21] sm:$0xff]
        %v1384 = vld [vmem:[%s339 + $0x31] sm:$0xff]
        %v1385 = vld [vmem:[%s339 + $0x39] sm:$0xff]
        %v1386 = vld [vmem:[%s339 + $0x49] sm:$0xff]
        %v1387 = vld [vmem:[%s339 + $0x51] sm:$0xff]
        %v1388 = vld [vmem:[%s339 + $0x61] sm:$0xff]
        %v1389 = vld [vmem:[%s339 + $0x69] sm:$0xff]
        %v1390 = vld [vmem:[%s339 + $0x79] sm:$0xff]
        %v1391 = vld [vmem:[%s339 + $0x81] sm:$0xff]
        %v1392 = vld [vmem:[%s339 + $0x91] sm:$0xff]
        %v1393 = vld [vmem:[%s339 + $0x99] sm:$0xff]
        %v1394 = vld [vmem:[%s339 + $0xa9] sm:$0xff]
        %v1395 = vld [vmem:[%s339 + $0xb1] sm:$0xff]
        %v1396 = vld [vmem:[%s339 + $0xc1] sm:$0xff]
        %v1397 = vld [vmem:[%s339 + $0xc9] sm:$0xff]
        %v1398 = vld [vmem:[%s339 + $0xd9] sm:$0xff]
        %v1399 = vld [vmem:[%s339 + $0xe1] sm:$0xff]
        %v1400 = vld [vmem:[%s339 + $0xf1] sm:$0xff]
        %v1401 = vld [vmem:[%s339 + $0xf9] sm:$0xff]
        %v1402 = vld [vmem:[%s339 + $0x109] sm:$0xff]
        %v1403 = vld [vmem:[%s339 + $0x111] sm:$0xff]
        %v1404 = vld [vmem:[%s339 + $0x121] sm:$0xff]
        %v1405 = vld [vmem:[%s339 + $0x129] sm:$0xff]
        %v1406 = vld [vmem:[%s339 + $0x139] sm:$0xff]
        %v1407 = vld [vmem:[%s339 + $0x141] sm:$0xff]
        %v1408 = vld [vmem:[%s339 + $0x151] sm:$0xff]
        %v1409 = vld [vmem:[%s339 + $0x159] sm:$0xff]
        %v1410 = vld [vmem:[%s339 + $0x169] sm:$0xff]
        %v1411 = vld [vmem:[%s339 + $0x171] sm:$0xff]
        %s1412 = scalar_lea.vmem [#allocation8], 512
        %v1413 = vld [vmem:[%s1412] sm:$0xff]
        %v1414 = vld [vmem:[%s1412 + $0x8] sm:$0xff]
        %v1415 = vld [vmem:[%s1412 + $0x10] sm:$0xff]
        %v1416 = vld [vmem:[%s1412 + $0x18] sm:$0xff]
        %v1417 = vld [vmem:[%s1412 + $0x20] sm:$0xff]
        %v1418 = vld [vmem:[%s1412 + $0x28] sm:$0xff]
        %v1419 = vld [vmem:[%s1412 + $0x30] sm:$0xff]
        %v1420 = vld [vmem:[%s1412 + $0x38] sm:$0xff]
        %v1421 = vld [vmem:[%s1412 + $0x40] sm:$0xff]
        %v1422 = vld [vmem:[%s1412 + $0x48] sm:$0xff]
        %v1423 = vld [vmem:[%s1412 + $0x50] sm:$0xff]
        %v1424 = vld [vmem:[%s1412 + $0x58] sm:$0xff]
        %v1425 = vld [vmem:[%s1412 + $0x60] sm:$0xff]
        %v1426 = vld [vmem:[%s1412 + $0x68] sm:$0xff]
        %v1427 = vld [vmem:[%s1412 + $0x70] sm:$0xff]
        %v1428 = vld [vmem:[%s1412 + $0x78] sm:$0xff]
        %1429 = vmatpush.msra.mxu0 %v1428
        %1430 = vmatpush.msra.mxu0 %v1427
        %1431 = vmatpush.msra.mxu0 %v1426
        %1432 = vmatpush.msra.mxu0 %v1425
        %1433 = vmatpush.msra.mxu0 %v1424
        %1434 = vmatpush.msra.mxu0 %v1423
        %1435 = vmatpush.msra.mxu0 %v1422
        %1436 = vmatpush.msra.mxu0 %v1421
        %1437 = vmatpush.msra.mxu0 %v1420
        %1438 = vmatpush.msra.mxu0 %v1419
        %1439 = vmatpush.msra.mxu0 %v1418
        %1440 = vmatpush.msra.mxu0 %v1417
        %1441 = vmatpush.msra.mxu0 %v1416
        %1442 = vmatpush.msra.mxu0 %v1415
        %1443 = vmatpush.msra.mxu0 %v1414
        %1444 = vmatpush.msra.mxu0 %v1413
        %1445 = vmatmul.f32.gmra.mxu0 %v1380
        %v1446 = vpop.f32.mrf.mxu0
        %v1447 = vadd.f32 0.0, %v1446
        %1448 = vmatmul.f32.gmra.mxu0 %v1381
        %v1449 = vpop.f32.mrf.mxu0
        %v1450 = vadd.f32 0.0, %v1449
        %1451 = vmatmul.f32.gmra.mxu0 %v1382
        %v1452 = vpop.f32.mrf.mxu0
        %v1453 = vadd.f32 0.0, %v1452
        %1454 = vmatmul.f32.gmra.mxu0 %v1383
        %v1455 = vpop.f32.mrf.mxu0
        %v1456 = vadd.f32 0.0, %v1455
        %1457 = vmatmul.f32.gmra.mxu0 %v1384
        %v1458 = vpop.f32.mrf.mxu0
        %v1459 = vadd.f32 0.0, %v1458
        %1460 = vmatmul.f32.gmra.mxu0 %v1385
        %v1461 = vpop.f32.mrf.mxu0
        %v1462 = vadd.f32 0.0, %v1461
        %1463 = vmatmul.f32.gmra.mxu0 %v1386
        %v1464 = vpop.f32.mrf.mxu0
        %v1465 = vadd.f32 0.0, %v1464
        %1466 = vmatmul.f32.gmra.mxu0 %v1387
        %v1467 = vpop.f32.mrf.mxu0
        %v1468 = vadd.f32 0.0, %v1467
        %1469 = vmatmul.f32.gmra.mxu0 %v1388
        %v1470 = vpop.f32.mrf.mxu0
        %v1471 = vadd.f32 0.0, %v1470
        %1472 = vmatmul.f32.gmra.mxu0 %v1389
        %v1473 = vpop.f32.mrf.mxu0
        %v1474 = vadd.f32 0.0, %v1473
        %1475 = vmatmul.f32.gmra.mxu0 %v1390
        %v1476 = vpop.f32.mrf.mxu0
        %v1477 = vadd.f32 0.0, %v1476
        %1478 = vmatmul.f32.gmra.mxu0 %v1391
        %v1479 = vpop.f32.mrf.mxu0
        %v1480 = vadd.f32 0.0, %v1479
        %1481 = vmatmul.f32.gmra.mxu0 %v1392
        %v1482 = vpop.f32.mrf.mxu0
        %v1483 = vadd.f32 0.0, %v1482
        %1484 = vmatmul.f32.gmra.mxu0 %v1393
        %v1485 = vpop.f32.mrf.mxu0
        %v1486 = vadd.f32 0.0, %v1485
        %1487 = vmatmul.f32.gmra.mxu0 %v1394
        %v1488 = vpop.f32.mrf.mxu0
        %v1489 = vadd.f32 0.0, %v1488
        %1490 = vmatmul.f32.gmra.mxu0 %v1395
        %v1491 = vpop.f32.mrf.mxu0
        %v1492 = vadd.f32 0.0, %v1491
        %1493 = vmatmul.f32.gmra.mxu0 %v1396
        %v1494 = vpop.f32.mrf.mxu0
        %v1495 = vadd.f32 0.0, %v1494
        %1496 = vmatmul.f32.gmra.mxu0 %v1397
        %v1497 = vpop.f32.mrf.mxu0
        %v1498 = vadd.f32 0.0, %v1497
        %1499 = vmatmul.f32.gmra.mxu0 %v1398
        %v1500 = vpop.f32.mrf.mxu0
        %v1501 = vadd.f32 0.0, %v1500
        %1502 = vmatmul.f32.gmra.mxu0 %v1399
        %v1503 = vpop.f32.mrf.mxu0
        %v1504 = vadd.f32 0.0, %v1503
        %1505 = vmatmul.f32.gmra.mxu0 %v1400
        %v1506 = vpop.f32.mrf.mxu0
        %v1507 = vadd.f32 0.0, %v1506
        %1508 = vmatmul.f32.gmra.mxu0 %v1401
        %v1509 = vpop.f32.mrf.mxu0
        %v1510 = vadd.f32 0.0, %v1509
        %1511 = vmatmul.f32.gmra.mxu0 %v1402
        %v1512 = vpop.f32.mrf.mxu0
        %v1513 = vadd.f32 0.0, %v1512
        %1514 = vmatmul.f32.gmra.mxu0 %v1403
        %v1515 = vpop.f32.mrf.mxu0
        %v1516 = vadd.f32 0.0, %v1515
        %1517 = vmatmul.f32.gmra.mxu0 %v1404
        %v1518 = vpop.f32.mrf.mxu0
        %v1519 = vadd.f32 0.0, %v1518
        %1520 = vmatmul.f32.gmra.mxu0 %v1405
        %v1521 = vpop.f32.mrf.mxu0
        %v1522 = vadd.f32 0.0, %v1521
        %1523 = vmatmul.f32.gmra.mxu0 %v1406
        %v1524 = vpop.f32.mrf.mxu0
        %v1525 = vadd.f32 0.0, %v1524
        %1526 = vmatmul.f32.gmra.mxu0 %v1407
        %v1527 = vpop.f32.mrf.mxu0
        %v1528 = vadd.f32 0.0, %v1527
        %1529 = vmatmul.f32.gmra.mxu0 %v1408
        %v1530 = vpop.f32.mrf.mxu0
        %v1531 = vadd.f32 0.0, %v1530
        %1532 = vmatmul.f32.gmra.mxu0 %v1409
        %v1533 = vpop.f32.mrf.mxu0
        %v1534 = vadd.f32 0.0, %v1533
        %1535 = vmatmul.f32.gmra.mxu0 %v1410
        %v1536 = vpop.f32.mrf.mxu0
        %v1537 = vadd.f32 0.0, %v1536
        %1538 = vmatmul.f32.gmra.mxu0 %v1411
        %v1539 = vpop.f32.mrf.mxu0
        %v1540 = vadd.f32 0.0, %v1539
        %1541 = vdwg.mxu0
        %v1542 = vadd.f32 %v1348, %v1447
        %v1543 = vadd.f32 %v1349, %v1450
        %v1544 = vadd.f32 %v1350, %v1453
        %v1545 = vadd.f32 %v1351, %v1456
        %v1546 = vadd.f32 %v1352, %v1459
        %v1547 = vadd.f32 %v1353, %v1462
        %v1548 = vadd.f32 %v1354, %v1465
        %v1549 = vadd.f32 %v1355, %v1468
        %v1550 = vadd.f32 %v1356, %v1471
        %v1551 = vadd.f32 %v1357, %v1474
        %v1552 = vadd.f32 %v1358, %v1477
        %v1553 = vadd.f32 %v1359, %v1480
        %v1554 = vadd.f32 %v1360, %v1483
        %v1555 = vadd.f32 %v1361, %v1486
        %v1556 = vadd.f32 %v1362, %v1489
        %v1557 = vadd.f32 %v1363, %v1492
        %v1558 = vadd.f32 %v1364, %v1495
        %v1559 = vadd.f32 %v1365, %v1498
        %v1560 = vadd.f32 %v1366, %v1501
        %v1561 = vadd.f32 %v1367, %v1504
        %v1562 = vadd.f32 %v1368, %v1507
        %v1563 = vadd.f32 %v1369, %v1510
        %v1564 = vadd.f32 %v1370, %v1513
        %v1565 = vadd.f32 %v1371, %v1516
        %v1566 = vadd.f32 %v1372, %v1519
        %v1567 = vadd.f32 %v1373, %v1522
        %v1568 = vadd.f32 %v1374, %v1525
        %v1569 = vadd.f32 %v1375, %v1528
        %v1570 = vadd.f32 %v1376, %v1531
        %v1571 = vadd.f32 %v1377, %v1534
        %v1572 = vadd.f32 %v1378, %v1537
        %v1573 = vadd.f32 %v1379, %v1540
        %v1574 = vld [vmem:[%s339 + $0x2] sm:$0xff]
        %v1575 = vld [vmem:[%s339 + $0xa] sm:$0xff]
        %v1576 = vld [vmem:[%s339 + $0x1a] sm:$0xff]
        %v1577 = vld [vmem:[%s339 + $0x22] sm:$0xff]
        %v1578 = vld [vmem:[%s339 + $0x32] sm:$0xff]
        %v1579 = vld [vmem:[%s339 + $0x3a] sm:$0xff]
        %v1580 = vld [vmem:[%s339 + $0x4a] sm:$0xff]
        %v1581 = vld [vmem:[%s339 + $0x52] sm:$0xff]
        %v1582 = vld [vmem:[%s339 + $0x62] sm:$0xff]
        %v1583 = vld [vmem:[%s339 + $0x6a] sm:$0xff]
        %v1584 = vld [vmem:[%s339 + $0x7a] sm:$0xff]
        %v1585 = vld [vmem:[%s339 + $0x82] sm:$0xff]
        %v1586 = vld [vmem:[%s339 + $0x92] sm:$0xff]
        %v1587 = vld [vmem:[%s339 + $0x9a] sm:$0xff]
        %v1588 = vld [vmem:[%s339 + $0xaa] sm:$0xff]
        %v1589 = vld [vmem:[%s339 + $0xb2] sm:$0xff]
        %v1590 = vld [vmem:[%s339 + $0xc2] sm:$0xff]
        %v1591 = vld [vmem:[%s339 + $0xca] sm:$0xff]
        %v1592 = vld [vmem:[%s339 + $0xda] sm:$0xff]
        %v1593 = vld [vmem:[%s339 + $0xe2] sm:$0xff]
        %v1594 = vld [vmem:[%s339 + $0xf2] sm:$0xff]
        %v1595 = vld [vmem:[%s339 + $0xfa] sm:$0xff]
        %v1596 = vld [vmem:[%s339 + $0x10a] sm:$0xff]
        %v1597 = vld [vmem:[%s339 + $0x112] sm:$0xff]
        %v1598 = vld [vmem:[%s339 + $0x122] sm:$0xff]
        %v1599 = vld [vmem:[%s339 + $0x12a] sm:$0xff]
        %v1600 = vld [vmem:[%s339 + $0x13a] sm:$0xff]
        %v1601 = vld [vmem:[%s339 + $0x142] sm:$0xff]
        %v1602 = vld [vmem:[%s339 + $0x152] sm:$0xff]
        %v1603 = vld [vmem:[%s339 + $0x15a] sm:$0xff]
        %v1604 = vld [vmem:[%s339 + $0x16a] sm:$0xff]
        %v1605 = vld [vmem:[%s339 + $0x172] sm:$0xff]
        %s1606 = scalar_lea.vmem [#allocation8], 640
        %v1607 = vld [vmem:[%s1606] sm:$0xff]
        %v1608 = vld [vmem:[%s1606 + $0x8] sm:$0xff]
        %v1609 = vld [vmem:[%s1606 + $0x10] sm:$0xff]
        %v1610 = vld [vmem:[%s1606 + $0x18] sm:$0xff]
        %v1611 = vld [vmem:[%s1606 + $0x20] sm:$0xff]
        %v1612 = vld [vmem:[%s1606 + $0x28] sm:$0xff]
        %v1613 = vld [vmem:[%s1606 + $0x30] sm:$0xff]
        %v1614 = vld [vmem:[%s1606 + $0x38] sm:$0xff]
        %v1615 = vld [vmem:[%s1606 + $0x40] sm:$0xff]
        %v1616 = vld [vmem:[%s1606 + $0x48] sm:$0xff]
        %v1617 = vld [vmem:[%s1606 + $0x50] sm:$0xff]
        %v1618 = vld [vmem:[%s1606 + $0x58] sm:$0xff]
        %v1619 = vld [vmem:[%s1606 + $0x60] sm:$0xff]
        %v1620 = vld [vmem:[%s1606 + $0x68] sm:$0xff]
        %v1621 = vld [vmem:[%s1606 + $0x70] sm:$0xff]
        %v1622 = vld [vmem:[%s1606 + $0x78] sm:$0xff]
        %1623 = vmatpush.msra.mxu0 %v1622
        %1624 = vmatpush.msra.mxu0 %v1621
        %1625 = vmatpush.msra.mxu0 %v1620
        %1626 = vmatpush.msra.mxu0 %v1619
        %1627 = vmatpush.msra.mxu0 %v1618
        %1628 = vmatpush.msra.mxu0 %v1617
        %1629 = vmatpush.msra.mxu0 %v1616
        %1630 = vmatpush.msra.mxu0 %v1615
        %1631 = vmatpush.msra.mxu0 %v1614
        %1632 = vmatpush.msra.mxu0 %v1613
        %1633 = vmatpush.msra.mxu0 %v1612
        %1634 = vmatpush.msra.mxu0 %v1611
        %1635 = vmatpush.msra.mxu0 %v1610
        %1636 = vmatpush.msra.mxu0 %v1609
        %1637 = vmatpush.msra.mxu0 %v1608
        %1638 = vmatpush.msra.mxu0 %v1607
        %1639 = vmatmul.f32.gmra.mxu0 %v1574
        %v1640 = vpop.f32.mrf.mxu0
        %v1641 = vadd.f32 0.0, %v1640
        %1642 = vmatmul.f32.gmra.mxu0 %v1575
        %v1643 = vpop.f32.mrf.mxu0
        %v1644 = vadd.f32 0.0, %v1643
        %1645 = vmatmul.f32.gmra.mxu0 %v1576
        %v1646 = vpop.f32.mrf.mxu0
        %v1647 = vadd.f32 0.0, %v1646
        %1648 = vmatmul.f32.gmra.mxu0 %v1577
        %v1649 = vpop.f32.mrf.mxu0
        %v1650 = vadd.f32 0.0, %v1649
        %1651 = vmatmul.f32.gmra.mxu0 %v1578
        %v1652 = vpop.f32.mrf.mxu0
        %v1653 = vadd.f32 0.0, %v1652
        %1654 = vmatmul.f32.gmra.mxu0 %v1579
        %v1655 = vpop.f32.mrf.mxu0
        %v1656 = vadd.f32 0.0, %v1655
        %1657 = vmatmul.f32.gmra.mxu0 %v1580
        %v1658 = vpop.f32.mrf.mxu0
        %v1659 = vadd.f32 0.0, %v1658
        %1660 = vmatmul.f32.gmra.mxu0 %v1581
        %v1661 = vpop.f32.mrf.mxu0
        %v1662 = vadd.f32 0.0, %v1661
        %1663 = vmatmul.f32.gmra.mxu0 %v1582
        %v1664 = vpop.f32.mrf.mxu0
        %v1665 = vadd.f32 0.0, %v1664
        %1666 = vmatmul.f32.gmra.mxu0 %v1583
        %v1667 = vpop.f32.mrf.mxu0
        %v1668 = vadd.f32 0.0, %v1667
        %1669 = vmatmul.f32.gmra.mxu0 %v1584
        %v1670 = vpop.f32.mrf.mxu0
        %v1671 = vadd.f32 0.0, %v1670
        %1672 = vmatmul.f32.gmra.mxu0 %v1585
        %v1673 = vpop.f32.mrf.mxu0
        %v1674 = vadd.f32 0.0, %v1673
        %1675 = vmatmul.f32.gmra.mxu0 %v1586
        %v1676 = vpop.f32.mrf.mxu0
        %v1677 = vadd.f32 0.0, %v1676
        %1678 = vmatmul.f32.gmra.mxu0 %v1587
        %v1679 = vpop.f32.mrf.mxu0
        %v1680 = vadd.f32 0.0, %v1679
        %1681 = vmatmul.f32.gmra.mxu0 %v1588
        %v1682 = vpop.f32.mrf.mxu0
        %v1683 = vadd.f32 0.0, %v1682
        %1684 = vmatmul.f32.gmra.mxu0 %v1589
        %v1685 = vpop.f32.mrf.mxu0
        %v1686 = vadd.f32 0.0, %v1685
        %1687 = vmatmul.f32.gmra.mxu0 %v1590
        %v1688 = vpop.f32.mrf.mxu0
        %v1689 = vadd.f32 0.0, %v1688
        %1690 = vmatmul.f32.gmra.mxu0 %v1591
        %v1691 = vpop.f32.mrf.mxu0
        %v1692 = vadd.f32 0.0, %v1691
        %1693 = vmatmul.f32.gmra.mxu0 %v1592
        %v1694 = vpop.f32.mrf.mxu0
        %v1695 = vadd.f32 0.0, %v1694
        %1696 = vmatmul.f32.gmra.mxu0 %v1593
        %v1697 = vpop.f32.mrf.mxu0
        %v1698 = vadd.f32 0.0, %v1697
        %1699 = vmatmul.f32.gmra.mxu0 %v1594
        %v1700 = vpop.f32.mrf.mxu0
        %v1701 = vadd.f32 0.0, %v1700
        %1702 = vmatmul.f32.gmra.mxu0 %v1595
        %v1703 = vpop.f32.mrf.mxu0
        %v1704 = vadd.f32 0.0, %v1703
        %1705 = vmatmul.f32.gmra.mxu0 %v1596
        %v1706 = vpop.f32.mrf.mxu0
        %v1707 = vadd.f32 0.0, %v1706
        %1708 = vmatmul.f32.gmra.mxu0 %v1597
        %v1709 = vpop.f32.mrf.mxu0
        %v1710 = vadd.f32 0.0, %v1709
        %1711 = vmatmul.f32.gmra.mxu0 %v1598
        %v1712 = vpop.f32.mrf.mxu0
        %v1713 = vadd.f32 0.0, %v1712
        %1714 = vmatmul.f32.gmra.mxu0 %v1599
        %v1715 = vpop.f32.mrf.mxu0
        %v1716 = vadd.f32 0.0, %v1715
        %1717 = vmatmul.f32.gmra.mxu0 %v1600
        %v1718 = vpop.f32.mrf.mxu0
        %v1719 = vadd.f32 0.0, %v1718
        %1720 = vmatmul.f32.gmra.mxu0 %v1601
        %v1721 = vpop.f32.mrf.mxu0
        %v1722 = vadd.f32 0.0, %v1721
        %1723 = vmatmul.f32.gmra.mxu0 %v1602
        %v1724 = vpop.f32.mrf.mxu0
        %v1725 = vadd.f32 0.0, %v1724
        %1726 = vmatmul.f32.gmra.mxu0 %v1603
        %v1727 = vpop.f32.mrf.mxu0
        %v1728 = vadd.f32 0.0, %v1727
        %1729 = vmatmul.f32.gmra.mxu0 %v1604
        %v1730 = vpop.f32.mrf.mxu0
        %v1731 = vadd.f32 0.0, %v1730
        %1732 = vmatmul.f32.gmra.mxu0 %v1605
        %v1733 = vpop.f32.mrf.mxu0
        %v1734 = vadd.f32 0.0, %v1733
        %1735 = vdwg.mxu0
        %v1736 = vadd.f32 %v1542, %v1641
        %v1737 = vadd.f32 %v1543, %v1644
        %v1738 = vadd.f32 %v1544, %v1647
        %v1739 = vadd.f32 %v1545, %v1650
        %v1740 = vadd.f32 %v1546, %v1653
        %v1741 = vadd.f32 %v1547, %v1656
        %v1742 = vadd.f32 %v1548, %v1659
        %v1743 = vadd.f32 %v1549, %v1662
        %v1744 = vadd.f32 %v1550, %v1665
        %v1745 = vadd.f32 %v1551, %v1668
        %v1746 = vadd.f32 %v1552, %v1671
        %v1747 = vadd.f32 %v1553, %v1674
        %v1748 = vadd.f32 %v1554, %v1677
        %v1749 = vadd.f32 %v1555, %v1680
        %v1750 = vadd.f32 %v1556, %v1683
        %v1751 = vadd.f32 %v1557, %v1686
        %v1752 = vadd.f32 %v1558, %v1689
        %v1753 = vadd.f32 %v1559, %v1692
        %v1754 = vadd.f32 %v1560, %v1695
        %v1755 = vadd.f32 %v1561, %v1698
        %v1756 = vadd.f32 %v1562, %v1701
        %v1757 = vadd.f32 %v1563, %v1704
        %v1758 = vadd.f32 %v1564, %v1707
        %v1759 = vadd.f32 %v1565, %v1710
        %v1760 = vadd.f32 %v1566, %v1713
        %v1761 = vadd.f32 %v1567, %v1716
        %v1762 = vadd.f32 %v1568, %v1719
        %v1763 = vadd.f32 %v1569, %v1722
        %v1764 = vadd.f32 %v1570, %v1725
        %v1765 = vadd.f32 %v1571, %v1728
        %v1766 = vadd.f32 %v1572, %v1731
        %v1767 = vadd.f32 %v1573, %v1734
        %s1768 = scalar_lea.vmem [#allocation2], 48
        %v1769 = vld [vmem:[%s1768] sm:$0xff]
        %v1770 = vld [vmem:[%s1768 + $0x8] sm:$0xff]
        %v1771 = vld [vmem:[%s1768 + $0x18] sm:$0xff]
        %v1772 = vld [vmem:[%s1768 + $0x20] sm:$0xff]
        %v1773 = vld [vmem:[%s1768 + $0x30] sm:$0xff]
        %v1774 = vld [vmem:[%s1768 + $0x38] sm:$0xff]
        %v1775 = vld [vmem:[%s1768 + $0x48] sm:$0xff]
        %v1776 = vld [vmem:[%s1768 + $0x50] sm:$0xff]
        %v1777 = vld [vmem:[%s1768 + $0x60] sm:$0xff]
        %v1778 = vld [vmem:[%s1768 + $0x68] sm:$0xff]
        %v1779 = vld [vmem:[%s1768 + $0x78] sm:$0xff]
        %v1780 = vld [vmem:[%s1768 + $0x80] sm:$0xff]
        %v1781 = vld [vmem:[%s1768 + $0x90] sm:$0xff]
        %v1782 = vld [vmem:[%s1768 + $0x98] sm:$0xff]
        %v1783 = vld [vmem:[%s1768 + $0xa8] sm:$0xff]
        %v1784 = vld [vmem:[%s1768 + $0xb0] sm:$0xff]
        %v1785 = vld [vmem:[%s1768 + $0xc0] sm:$0xff]
        %v1786 = vld [vmem:[%s1768 + $0xc8] sm:$0xff]
        %v1787 = vld [vmem:[%s1768 + $0xd8] sm:$0xff]
        %v1788 = vld [vmem:[%s1768 + $0xe0] sm:$0xff]
        %v1789 = vld [vmem:[%s1768 + $0xf0] sm:$0xff]
        %v1790 = vld [vmem:[%s1768 + $0xf8] sm:$0xff]
        %v1791 = vld [vmem:[%s1768 + $0x108] sm:$0xff]
        %v1792 = vld [vmem:[%s1768 + $0x110] sm:$0xff]
        %v1793 = vld [vmem:[%s1768 + $0x120] sm:$0xff]
        %v1794 = vld [vmem:[%s1768 + $0x128] sm:$0xff]
        %v1795 = vld [vmem:[%s1768 + $0x138] sm:$0xff]
        %v1796 = vld [vmem:[%s1768 + $0x140] sm:$0xff]
        %v1797 = vld [vmem:[%s1768 + $0x150] sm:$0xff]
        %v1798 = vld [vmem:[%s1768 + $0x158] sm:$0xff]
        %v1799 = vld [vmem:[%s1768 + $0x168] sm:$0xff]
        %v1800 = vld [vmem:[%s1768 + $0x170] sm:$0xff]
        %s1801 = scalar_lea.vmem [#allocation8], 768
        %v1802 = vld [vmem:[%s1801] sm:$0xff]
        %v1803 = vld [vmem:[%s1801 + $0x8] sm:$0xff]
        %v1804 = vld [vmem:[%s1801 + $0x10] sm:$0xff]
        %v1805 = vld [vmem:[%s1801 + $0x18] sm:$0xff]
        %v1806 = vld [vmem:[%s1801 + $0x20] sm:$0xff]
        %v1807 = vld [vmem:[%s1801 + $0x28] sm:$0xff]
        %v1808 = vld [vmem:[%s1801 + $0x30] sm:$0xff]
        %v1809 = vld [vmem:[%s1801 + $0x38] sm:$0xff]
        %v1810 = vld [vmem:[%s1801 + $0x40] sm:$0xff]
        %v1811 = vld [vmem:[%s1801 + $0x48] sm:$0xff]
        %v1812 = vld [vmem:[%s1801 + $0x50] sm:$0xff]
        %v1813 = vld [vmem:[%s1801 + $0x58] sm:$0xff]
        %v1814 = vld [vmem:[%s1801 + $0x60] sm:$0xff]
        %v1815 = vld [vmem:[%s1801 + $0x68] sm:$0xff]
        %v1816 = vld [vmem:[%s1801 + $0x70] sm:$0xff]
        %v1817 = vld [vmem:[%s1801 + $0x78] sm:$0xff]
        %1818 = vmatpush.msra.mxu0 %v1817
        %1819 = vmatpush.msra.mxu0 %v1816
        %1820 = vmatpush.msra.mxu0 %v1815
        %1821 = vmatpush.msra.mxu0 %v1814
        %1822 = vmatpush.msra.mxu0 %v1813
        %1823 = vmatpush.msra.mxu0 %v1812
        %1824 = vmatpush.msra.mxu0 %v1811
        %1825 = vmatpush.msra.mxu0 %v1810
        %1826 = vmatpush.msra.mxu0 %v1809
        %1827 = vmatpush.msra.mxu0 %v1808
        %1828 = vmatpush.msra.mxu0 %v1807
        %1829 = vmatpush.msra.mxu0 %v1806
        %1830 = vmatpush.msra.mxu0 %v1805
        %1831 = vmatpush.msra.mxu0 %v1804
        %1832 = vmatpush.msra.mxu0 %v1803
        %1833 = vmatpush.msra.mxu0 %v1802
        %1834 = vmatmul.f32.gmra.mxu0 %v1769
        %v1835 = vpop.f32.mrf.mxu0
        %v1836 = vadd.f32 0.0, %v1835
        %1837 = vmatmul.f32.gmra.mxu0 %v1770
        %v1838 = vpop.f32.mrf.mxu0
        %v1839 = vadd.f32 0.0, %v1838
        %1840 = vmatmul.f32.gmra.mxu0 %v1771
        %v1841 = vpop.f32.mrf.mxu0
        %v1842 = vadd.f32 0.0, %v1841
        %1843 = vmatmul.f32.gmra.mxu0 %v1772
        %v1844 = vpop.f32.mrf.mxu0
        %v1845 = vadd.f32 0.0, %v1844
        %1846 = vmatmul.f32.gmra.mxu0 %v1773
        %v1847 = vpop.f32.mrf.mxu0
        %v1848 = vadd.f32 0.0, %v1847
        %1849 = vmatmul.f32.gmra.mxu0 %v1774
        %v1850 = vpop.f32.mrf.mxu0
        %v1851 = vadd.f32 0.0, %v1850
        %1852 = vmatmul.f32.gmra.mxu0 %v1775
        %v1853 = vpop.f32.mrf.mxu0
        %v1854 = vadd.f32 0.0, %v1853
        %1855 = vmatmul.f32.gmra.mxu0 %v1776
        %v1856 = vpop.f32.mrf.mxu0
        %v1857 = vadd.f32 0.0, %v1856
        %1858 = vmatmul.f32.gmra.mxu0 %v1777
        %v1859 = vpop.f32.mrf.mxu0
        %v1860 = vadd.f32 0.0, %v1859
        %1861 = vmatmul.f32.gmra.mxu0 %v1778
        %v1862 = vpop.f32.mrf.mxu0
        %v1863 = vadd.f32 0.0, %v1862
        %1864 = vmatmul.f32.gmra.mxu0 %v1779
        %v1865 = vpop.f32.mrf.mxu0
        %v1866 = vadd.f32 0.0, %v1865
        %1867 = vmatmul.f32.gmra.mxu0 %v1780
        %v1868 = vpop.f32.mrf.mxu0
        %v1869 = vadd.f32 0.0, %v1868
        %1870 = vmatmul.f32.gmra.mxu0 %v1781
        %v1871 = vpop.f32.mrf.mxu0
        %v1872 = vadd.f32 0.0, %v1871
        %1873 = vmatmul.f32.gmra.mxu0 %v1782
        %v1874 = vpop.f32.mrf.mxu0
        %v1875 = vadd.f32 0.0, %v1874
        %1876 = vmatmul.f32.gmra.mxu0 %v1783
        %v1877 = vpop.f32.mrf.mxu0
        %v1878 = vadd.f32 0.0, %v1877
        %1879 = vmatmul.f32.gmra.mxu0 %v1784
        %v1880 = vpop.f32.mrf.mxu0
        %v1881 = vadd.f32 0.0, %v1880
        %1882 = vmatmul.f32.gmra.mxu0 %v1785
        %v1883 = vpop.f32.mrf.mxu0
        %v1884 = vadd.f32 0.0, %v1883
        %1885 = vmatmul.f32.gmra.mxu0 %v1786
        %v1886 = vpop.f32.mrf.mxu0
        %v1887 = vadd.f32 0.0, %v1886
        %1888 = vmatmul.f32.gmra.mxu0 %v1787
        %v1889 = vpop.f32.mrf.mxu0
        %v1890 = vadd.f32 0.0, %v1889
        %1891 = vmatmul.f32.gmra.mxu0 %v1788
        %v1892 = vpop.f32.mrf.mxu0
        %v1893 = vadd.f32 0.0, %v1892
        %1894 = vmatmul.f32.gmra.mxu0 %v1789
        %v1895 = vpop.f32.mrf.mxu0
        %v1896 = vadd.f32 0.0, %v1895
        %1897 = vmatmul.f32.gmra.mxu0 %v1790
        %v1898 = vpop.f32.mrf.mxu0
        %v1899 = vadd.f32 0.0, %v1898
        %1900 = vmatmul.f32.gmra.mxu0 %v1791
        %v1901 = vpop.f32.mrf.mxu0
        %v1902 = vadd.f32 0.0, %v1901
        %1903 = vmatmul.f32.gmra.mxu0 %v1792
        %v1904 = vpop.f32.mrf.mxu0
        %v1905 = vadd.f32 0.0, %v1904
        %1906 = vmatmul.f32.gmra.mxu0 %v1793
        %v1907 = vpop.f32.mrf.mxu0
        %v1908 = vadd.f32 0.0, %v1907
        %1909 = vmatmul.f32.gmra.mxu0 %v1794
        %v1910 = vpop.f32.mrf.mxu0
        %v1911 = vadd.f32 0.0, %v1910
        %1912 = vmatmul.f32.gmra.mxu0 %v1795
        %v1913 = vpop.f32.mrf.mxu0
        %v1914 = vadd.f32 0.0, %v1913
        %1915 = vmatmul.f32.gmra.mxu0 %v1796
        %v1916 = vpop.f32.mrf.mxu0
        %v1917 = vadd.f32 0.0, %v1916
        %1918 = vmatmul.f32.gmra.mxu0 %v1797
        %v1919 = vpop.f32.mrf.mxu0
        %v1920 = vadd.f32 0.0, %v1919
        %1921 = vmatmul.f32.gmra.mxu0 %v1798
        %v1922 = vpop.f32.mrf.mxu0
        %v1923 = vadd.f32 0.0, %v1922
        %1924 = vmatmul.f32.gmra.mxu0 %v1799
        %v1925 = vpop.f32.mrf.mxu0
        %v1926 = vadd.f32 0.0, %v1925
        %1927 = vmatmul.f32.gmra.mxu0 %v1800
        %v1928 = vpop.f32.mrf.mxu0
        %v1929 = vadd.f32 0.0, %v1928
        %1930 = vdwg.mxu0
        %v1931 = vadd.f32 %v1736, %v1836
        %v1932 = vadd.f32 %v1737, %v1839
        %v1933 = vadd.f32 %v1738, %v1842
        %v1934 = vadd.f32 %v1739, %v1845
        %v1935 = vadd.f32 %v1740, %v1848
        %v1936 = vadd.f32 %v1741, %v1851
        %v1937 = vadd.f32 %v1742, %v1854
        %v1938 = vadd.f32 %v1743, %v1857
        %v1939 = vadd.f32 %v1744, %v1860
        %v1940 = vadd.f32 %v1745, %v1863
        %v1941 = vadd.f32 %v1746, %v1866
        %v1942 = vadd.f32 %v1747, %v1869
        %v1943 = vadd.f32 %v1748, %v1872
        %v1944 = vadd.f32 %v1749, %v1875
        %v1945 = vadd.f32 %v1750, %v1878
        %v1946 = vadd.f32 %v1751, %v1881
        %v1947 = vadd.f32 %v1752, %v1884
        %v1948 = vadd.f32 %v1753, %v1887
        %v1949 = vadd.f32 %v1754, %v1890
        %v1950 = vadd.f32 %v1755, %v1893
        %v1951 = vadd.f32 %v1756, %v1896
        %v1952 = vadd.f32 %v1757, %v1899
        %v1953 = vadd.f32 %v1758, %v1902
        %v1954 = vadd.f32 %v1759, %v1905
        %v1955 = vadd.f32 %v1760, %v1908
        %v1956 = vadd.f32 %v1761, %v1911
        %v1957 = vadd.f32 %v1762, %v1914
        %v1958 = vadd.f32 %v1763, %v1917
        %v1959 = vadd.f32 %v1764, %v1920
        %v1960 = vadd.f32 %v1765, %v1923
        %v1961 = vadd.f32 %v1766, %v1926
        %v1962 = vadd.f32 %v1767, %v1929
        %v1963 = vld [vmem:[%s1768 + $0x1] sm:$0xff]
        %v1964 = vld [vmem:[%s1768 + $0x9] sm:$0xff]
        %v1965 = vld [vmem:[%s1768 + $0x19] sm:$0xff]
        %v1966 = vld [vmem:[%s1768 + $0x21] sm:$0xff]
        %v1967 = vld [vmem:[%s1768 + $0x31] sm:$0xff]
        %v1968 = vld [vmem:[%s1768 + $0x39] sm:$0xff]
        %v1969 = vld [vmem:[%s1768 + $0x49] sm:$0xff]
        %v1970 = vld [vmem:[%s1768 + $0x51] sm:$0xff]
        %v1971 = vld [vmem:[%s1768 + $0x61] sm:$0xff]
        %v1972 = vld [vmem:[%s1768 + $0x69] sm:$0xff]
        %v1973 = vld [vmem:[%s1768 + $0x79] sm:$0xff]
        %v1974 = vld [vmem:[%s1768 + $0x81] sm:$0xff]
        %v1975 = vld [vmem:[%s1768 + $0x91] sm:$0xff]
        %v1976 = vld [vmem:[%s1768 + $0x99] sm:$0xff]
        %v1977 = vld [vmem:[%s1768 + $0xa9] sm:$0xff]
        %v1978 = vld [vmem:[%s1768 + $0xb1] sm:$0xff]
        %v1979 = vld [vmem:[%s1768 + $0xc1] sm:$0xff]
        %v1980 = vld [vmem:[%s1768 + $0xc9] sm:$0xff]
        %v1981 = vld [vmem:[%s1768 + $0xd9] sm:$0xff]
        %v1982 = vld [vmem:[%s1768 + $0xe1] sm:$0xff]
        %v1983 = vld [vmem:[%s1768 + $0xf1] sm:$0xff]
        %v1984 = vld [vmem:[%s1768 + $0xf9] sm:$0xff]
        %v1985 = vld [vmem:[%s1768 + $0x109] sm:$0xff]
        %v1986 = vld [vmem:[%s1768 + $0x111] sm:$0xff]
        %v1987 = vld [vmem:[%s1768 + $0x121] sm:$0xff]
        %v1988 = vld [vmem:[%s1768 + $0x129] sm:$0xff]
        %v1989 = vld [vmem:[%s1768 + $0x139] sm:$0xff]
        %v1990 = vld [vmem:[%s1768 + $0x141] sm:$0xff]
        %v1991 = vld [vmem:[%s1768 + $0x151] sm:$0xff]
        %v1992 = vld [vmem:[%s1768 + $0x159] sm:$0xff]
        %v1993 = vld [vmem:[%s1768 + $0x169] sm:$0xff]
        %v1994 = vld [vmem:[%s1768 + $0x171] sm:$0xff]
        %s1995 = scalar_lea.vmem [#allocation8], 896
        %v1996 = vld [vmem:[%s1995] sm:$0xff]
        %v1997 = vld [vmem:[%s1995 + $0x8] sm:$0xff]
        %v1998 = vld [vmem:[%s1995 + $0x10] sm:$0xff]
        %v1999 = vld [vmem:[%s1995 + $0x18] sm:$0xff]
        %v2000 = vld [vmem:[%s1995 + $0x20] sm:$0xff]
        %v2001 = vld [vmem:[%s1995 + $0x28] sm:$0xff]
        %v2002 = vld [vmem:[%s1995 + $0x30] sm:$0xff]
        %v2003 = vld [vmem:[%s1995 + $0x38] sm:$0xff]
        %v2004 = vld [vmem:[%s1995 + $0x40] sm:$0xff]
        %v2005 = vld [vmem:[%s1995 + $0x48] sm:$0xff]
        %v2006 = vld [vmem:[%s1995 + $0x50] sm:$0xff]
        %v2007 = vld [vmem:[%s1995 + $0x58] sm:$0xff]
        %v2008 = vld [vmem:[%s1995 + $0x60] sm:$0xff]
        %v2009 = vld [vmem:[%s1995 + $0x68] sm:$0xff]
        %v2010 = vld [vmem:[%s1995 + $0x70] sm:$0xff]
        %v2011 = vld [vmem:[%s1995 + $0x78] sm:$0xff]
        %2012 = vmatpush.msra.mxu0 %v2011
        %2013 = vmatpush.msra.mxu0 %v2010
        %2014 = vmatpush.msra.mxu0 %v2009
        %2015 = vmatpush.msra.mxu0 %v2008
        %2016 = vmatpush.msra.mxu0 %v2007
        %2017 = vmatpush.msra.mxu0 %v2006
        %2018 = vmatpush.msra.mxu0 %v2005
        %2019 = vmatpush.msra.mxu0 %v2004
        %2020 = vmatpush.msra.mxu0 %v2003
        %2021 = vmatpush.msra.mxu0 %v2002
        %2022 = vmatpush.msra.mxu0 %v2001
        %2023 = vmatpush.msra.mxu0 %v2000
        %2024 = vmatpush.msra.mxu0 %v1999
        %2025 = vmatpush.msra.mxu0 %v1998
        %2026 = vmatpush.msra.mxu0 %v1997
        %2027 = vmatpush.msra.mxu0 %v1996
        %2028 = vmatmul.f32.gmra.mxu0 %v1963
        %v2029 = vpop.f32.mrf.mxu0
        %v2030 = vadd.f32 0.0, %v2029
        %2031 = vmatmul.f32.gmra.mxu0 %v1964
        %v2032 = vpop.f32.mrf.mxu0
        %v2033 = vadd.f32 0.0, %v2032
        %2034 = vmatmul.f32.gmra.mxu0 %v1965
        %v2035 = vpop.f32.mrf.mxu0
        %v2036 = vadd.f32 0.0, %v2035
        %2037 = vmatmul.f32.gmra.mxu0 %v1966
        %v2038 = vpop.f32.mrf.mxu0
        %v2039 = vadd.f32 0.0, %v2038
        %2040 = vmatmul.f32.gmra.mxu0 %v1967
        %v2041 = vpop.f32.mrf.mxu0
        %v2042 = vadd.f32 0.0, %v2041
        %2043 = vmatmul.f32.gmra.mxu0 %v1968
        %v2044 = vpop.f32.mrf.mxu0
        %v2045 = vadd.f32 0.0, %v2044
        %2046 = vmatmul.f32.gmra.mxu0 %v1969
        %v2047 = vpop.f32.mrf.mxu0
        %v2048 = vadd.f32 0.0, %v2047
        %2049 = vmatmul.f32.gmra.mxu0 %v1970
        %v2050 = vpop.f32.mrf.mxu0
        %v2051 = vadd.f32 0.0, %v2050
        %2052 = vmatmul.f32.gmra.mxu0 %v1971
        %v2053 = vpop.f32.mrf.mxu0
        %v2054 = vadd.f32 0.0, %v2053
        %2055 = vmatmul.f32.gmra.mxu0 %v1972
        %v2056 = vpop.f32.mrf.mxu0
        %v2057 = vadd.f32 0.0, %v2056
        %2058 = vmatmul.f32.gmra.mxu0 %v1973
        %v2059 = vpop.f32.mrf.mxu0
        %v2060 = vadd.f32 0.0, %v2059
        %2061 = vmatmul.f32.gmra.mxu0 %v1974
        %v2062 = vpop.f32.mrf.mxu0
        %v2063 = vadd.f32 0.0, %v2062
        %2064 = vmatmul.f32.gmra.mxu0 %v1975
        %v2065 = vpop.f32.mrf.mxu0
        %v2066 = vadd.f32 0.0, %v2065
        %2067 = vmatmul.f32.gmra.mxu0 %v1976
        %v2068 = vpop.f32.mrf.mxu0
        %v2069 = vadd.f32 0.0, %v2068
        %2070 = vmatmul.f32.gmra.mxu0 %v1977
        %v2071 = vpop.f32.mrf.mxu0
        %v2072 = vadd.f32 0.0, %v2071
        %2073 = vmatmul.f32.gmra.mxu0 %v1978
        %v2074 = vpop.f32.mrf.mxu0
        %v2075 = vadd.f32 0.0, %v2074
        %2076 = vmatmul.f32.gmra.mxu0 %v1979
        %v2077 = vpop.f32.mrf.mxu0
        %v2078 = vadd.f32 0.0, %v2077
        %2079 = vmatmul.f32.gmra.mxu0 %v1980
        %v2080 = vpop.f32.mrf.mxu0
        %v2081 = vadd.f32 0.0, %v2080
        %2082 = vmatmul.f32.gmra.mxu0 %v1981
        %v2083 = vpop.f32.mrf.mxu0
        %v2084 = vadd.f32 0.0, %v2083
        %2085 = vmatmul.f32.gmra.mxu0 %v1982
        %v2086 = vpop.f32.mrf.mxu0
        %v2087 = vadd.f32 0.0, %v2086
        %2088 = vmatmul.f32.gmra.mxu0 %v1983
        %v2089 = vpop.f32.mrf.mxu0
        %v2090 = vadd.f32 0.0, %v2089
        %2091 = vmatmul.f32.gmra.mxu0 %v1984
        %v2092 = vpop.f32.mrf.mxu0
        %v2093 = vadd.f32 0.0, %v2092
        %2094 = vmatmul.f32.gmra.mxu0 %v1985
        %v2095 = vpop.f32.mrf.mxu0
        %v2096 = vadd.f32 0.0, %v2095
        %2097 = vmatmul.f32.gmra.mxu0 %v1986
        %v2098 = vpop.f32.mrf.mxu0
        %v2099 = vadd.f32 0.0, %v2098
        %2100 = vmatmul.f32.gmra.mxu0 %v1987
        %v2101 = vpop.f32.mrf.mxu0
        %v2102 = vadd.f32 0.0, %v2101
        %2103 = vmatmul.f32.gmra.mxu0 %v1988
        %v2104 = vpop.f32.mrf.mxu0
        %v2105 = vadd.f32 0.0, %v2104
        %2106 = vmatmul.f32.gmra.mxu0 %v1989
        %v2107 = vpop.f32.mrf.mxu0
        %v2108 = vadd.f32 0.0, %v2107
        %2109 = vmatmul.f32.gmra.mxu0 %v1990
        %v2110 = vpop.f32.mrf.mxu0
        %v2111 = vadd.f32 0.0, %v2110
        %2112 = vmatmul.f32.gmra.mxu0 %v1991
        %v2113 = vpop.f32.mrf.mxu0
        %v2114 = vadd.f32 0.0, %v2113
        %2115 = vmatmul.f32.gmra.mxu0 %v1992
        %v2116 = vpop.f32.mrf.mxu0
        %v2117 = vadd.f32 0.0, %v2116
        %2118 = vmatmul.f32.gmra.mxu0 %v1993
        %v2119 = vpop.f32.mrf.mxu0
        %v2120 = vadd.f32 0.0, %v2119
        %2121 = vmatmul.f32.gmra.mxu0 %v1994
        %v2122 = vpop.f32.mrf.mxu0
        %v2123 = vadd.f32 0.0, %v2122
        %2124 = vdwg.mxu0
        %v2125 = vadd.f32 %v1931, %v2030
        %v2126 = vadd.f32 %v1932, %v2033
        %v2127 = vadd.f32 %v1933, %v2036
        %v2128 = vadd.f32 %v1934, %v2039
        %v2129 = vadd.f32 %v1935, %v2042
        %v2130 = vadd.f32 %v1936, %v2045
        %v2131 = vadd.f32 %v1937, %v2048
        %v2132 = vadd.f32 %v1938, %v2051
        %v2133 = vadd.f32 %v1939, %v2054
        %v2134 = vadd.f32 %v1940, %v2057
        %v2135 = vadd.f32 %v1941, %v2060
        %v2136 = vadd.f32 %v1942, %v2063
        %v2137 = vadd.f32 %v1943, %v2066
        %v2138 = vadd.f32 %v1944, %v2069
        %v2139 = vadd.f32 %v1945, %v2072
        %v2140 = vadd.f32 %v1946, %v2075
        %v2141 = vadd.f32 %v1947, %v2078
        %v2142 = vadd.f32 %v1948, %v2081
        %v2143 = vadd.f32 %v1949, %v2084
        %v2144 = vadd.f32 %v1950, %v2087
        %v2145 = vadd.f32 %v1951, %v2090
        %v2146 = vadd.f32 %v1952, %v2093
        %v2147 = vadd.f32 %v1953, %v2096
        %v2148 = vadd.f32 %v1954, %v2099
        %v2149 = vadd.f32 %v1955, %v2102
        %v2150 = vadd.f32 %v1956, %v2105
        %v2151 = vadd.f32 %v1957, %v2108
        %v2152 = vadd.f32 %v1958, %v2111
        %v2153 = vadd.f32 %v1959, %v2114
        %v2154 = vadd.f32 %v1960, %v2117
        %v2155 = vadd.f32 %v1961, %v2120
        %v2156 = vadd.f32 %v1962, %v2123
        %v2157 = vld [vmem:[%s1768 + $0x2] sm:$0xff]
        %v2158 = vld [vmem:[%s1768 + $0xa] sm:$0xff]
        %v2159 = vld [vmem:[%s1768 + $0x1a] sm:$0xff]
        %v2160 = vld [vmem:[%s1768 + $0x22] sm:$0xff]
        %v2161 = vld [vmem:[%s1768 + $0x32] sm:$0xff]
        %v2162 = vld [vmem:[%s1768 + $0x3a] sm:$0xff]
        %v2163 = vld [vmem:[%s1768 + $0x4a] sm:$0xff]
        %v2164 = vld [vmem:[%s1768 + $0x52] sm:$0xff]
        %v2165 = vld [vmem:[%s1768 + $0x62] sm:$0xff]
        %v2166 = vld [vmem:[%s1768 + $0x6a] sm:$0xff]
        %v2167 = vld [vmem:[%s1768 + $0x7a] sm:$0xff]
        %v2168 = vld [vmem:[%s1768 + $0x82] sm:$0xff]
        %v2169 = vld [vmem:[%s1768 + $0x92] sm:$0xff]
        %v2170 = vld [vmem:[%s1768 + $0x9a] sm:$0xff]
        %v2171 = vld [vmem:[%s1768 + $0xaa] sm:$0xff]
        %v2172 = vld [vmem:[%s1768 + $0xb2] sm:$0xff]
        %v2173 = vld [vmem:[%s1768 + $0xc2] sm:$0xff]
        %v2174 = vld [vmem:[%s1768 + $0xca] sm:$0xff]
        %v2175 = vld [vmem:[%s1768 + $0xda] sm:$0xff]
        %v2176 = vld [vmem:[%s1768 + $0xe2] sm:$0xff]
        %v2177 = vld [vmem:[%s1768 + $0xf2] sm:$0xff]
        %v2178 = vld [vmem:[%s1768 + $0xfa] sm:$0xff]
        %v2179 = vld [vmem:[%s1768 + $0x10a] sm:$0xff]
        %v2180 = vld [vmem:[%s1768 + $0x112] sm:$0xff]
        %v2181 = vld [vmem:[%s1768 + $0x122] sm:$0xff]
        %v2182 = vld [vmem:[%s1768 + $0x12a] sm:$0xff]
        %v2183 = vld [vmem:[%s1768 + $0x13a] sm:$0xff]
        %v2184 = vld [vmem:[%s1768 + $0x142] sm:$0xff]
        %v2185 = vld [vmem:[%s1768 + $0x152] sm:$0xff]
        %v2186 = vld [vmem:[%s1768 + $0x15a] sm:$0xff]
        %v2187 = vld [vmem:[%s1768 + $0x16a] sm:$0xff]
        %v2188 = vld [vmem:[%s1768 + $0x172] sm:$0xff]
        %s2189 = scalar_lea.vmem [#allocation8], 1024
        %v2190 = vld [vmem:[%s2189] sm:$0xff]
        %v2191 = vld [vmem:[%s2189 + $0x8] sm:$0xff]
        %v2192 = vld [vmem:[%s2189 + $0x10] sm:$0xff]
        %v2193 = vld [vmem:[%s2189 + $0x18] sm:$0xff]
        %v2194 = vld [vmem:[%s2189 + $0x20] sm:$0xff]
        %v2195 = vld [vmem:[%s2189 + $0x28] sm:$0xff]
        %v2196 = vld [vmem:[%s2189 + $0x30] sm:$0xff]
        %v2197 = vld [vmem:[%s2189 + $0x38] sm:$0xff]
        %v2198 = vld [vmem:[%s2189 + $0x40] sm:$0xff]
        %v2199 = vld [vmem:[%s2189 + $0x48] sm:$0xff]
        %v2200 = vld [vmem:[%s2189 + $0x50] sm:$0xff]
        %v2201 = vld [vmem:[%s2189 + $0x58] sm:$0xff]
        %v2202 = vld [vmem:[%s2189 + $0x60] sm:$0xff]
        %v2203 = vld [vmem:[%s2189 + $0x68] sm:$0xff]
        %v2204 = vld [vmem:[%s2189 + $0x70] sm:$0xff]
        %v2205 = vld [vmem:[%s2189 + $0x78] sm:$0xff]
        %2206 = vmatpush.msra.mxu0 %v2205
        %2207 = vmatpush.msra.mxu0 %v2204
        %2208 = vmatpush.msra.mxu0 %v2203
        %2209 = vmatpush.msra.mxu0 %v2202
        %2210 = vmatpush.msra.mxu0 %v2201
        %2211 = vmatpush.msra.mxu0 %v2200
        %2212 = vmatpush.msra.mxu0 %v2199
        %2213 = vmatpush.msra.mxu0 %v2198
        %2214 = vmatpush.msra.mxu0 %v2197
        %2215 = vmatpush.msra.mxu0 %v2196
        %2216 = vmatpush.msra.mxu0 %v2195
        %2217 = vmatpush.msra.mxu0 %v2194
        %2218 = vmatpush.msra.mxu0 %v2193
        %2219 = vmatpush.msra.mxu0 %v2192
        %2220 = vmatpush.msra.mxu0 %v2191
        %2221 = vmatpush.msra.mxu0 %v2190
        %2222 = vmatmul.f32.gmra.mxu0 %v2157
        %v2223 = vpop.f32.mrf.mxu0
        %v2224 = vadd.f32 0.0, %v2223
        %2225 = vmatmul.f32.gmra.mxu0 %v2158
        %v2226 = vpop.f32.mrf.mxu0
        %v2227 = vadd.f32 0.0, %v2226
        %2228 = vmatmul.f32.gmra.mxu0 %v2159
        %v2229 = vpop.f32.mrf.mxu0
        %v2230 = vadd.f32 0.0, %v2229
        %2231 = vmatmul.f32.gmra.mxu0 %v2160
        %v2232 = vpop.f32.mrf.mxu0
        %v2233 = vadd.f32 0.0, %v2232
        %2234 = vmatmul.f32.gmra.mxu0 %v2161
        %v2235 = vpop.f32.mrf.mxu0
        %v2236 = vadd.f32 0.0, %v2235
        %2237 = vmatmul.f32.gmra.mxu0 %v2162
        %v2238 = vpop.f32.mrf.mxu0
        %v2239 = vadd.f32 0.0, %v2238
        %2240 = vmatmul.f32.gmra.mxu0 %v2163
        %v2241 = vpop.f32.mrf.mxu0
        %v2242 = vadd.f32 0.0, %v2241
        %2243 = vmatmul.f32.gmra.mxu0 %v2164
        %v2244 = vpop.f32.mrf.mxu0
        %v2245 = vadd.f32 0.0, %v2244
        %2246 = vmatmul.f32.gmra.mxu0 %v2165
        %v2247 = vpop.f32.mrf.mxu0
        %v2248 = vadd.f32 0.0, %v2247
        %2249 = vmatmul.f32.gmra.mxu0 %v2166
        %v2250 = vpop.f32.mrf.mxu0
        %v2251 = vadd.f32 0.0, %v2250
        %2252 = vmatmul.f32.gmra.mxu0 %v2167
        %v2253 = vpop.f32.mrf.mxu0
        %v2254 = vadd.f32 0.0, %v2253
        %2255 = vmatmul.f32.gmra.mxu0 %v2168
        %v2256 = vpop.f32.mrf.mxu0
        %v2257 = vadd.f32 0.0, %v2256
        %2258 = vmatmul.f32.gmra.mxu0 %v2169
        %v2259 = vpop.f32.mrf.mxu0
        %v2260 = vadd.f32 0.0, %v2259
        %2261 = vmatmul.f32.gmra.mxu0 %v2170
        %v2262 = vpop.f32.mrf.mxu0
        %v2263 = vadd.f32 0.0, %v2262
        %2264 = vmatmul.f32.gmra.mxu0 %v2171
        %v2265 = vpop.f32.mrf.mxu0
        %v2266 = vadd.f32 0.0, %v2265
        %2267 = vmatmul.f32.gmra.mxu0 %v2172
        %v2268 = vpop.f32.mrf.mxu0
        %v2269 = vadd.f32 0.0, %v2268
        %2270 = vmatmul.f32.gmra.mxu0 %v2173
        %v2271 = vpop.f32.mrf.mxu0
        %v2272 = vadd.f32 0.0, %v2271
        %2273 = vmatmul.f32.gmra.mxu0 %v2174
        %v2274 = vpop.f32.mrf.mxu0
        %v2275 = vadd.f32 0.0, %v2274
        %2276 = vmatmul.f32.gmra.mxu0 %v2175
        %v2277 = vpop.f32.mrf.mxu0
        %v2278 = vadd.f32 0.0, %v2277
        %2279 = vmatmul.f32.gmra.mxu0 %v2176
        %v2280 = vpop.f32.mrf.mxu0
        %v2281 = vadd.f32 0.0, %v2280
        %2282 = vmatmul.f32.gmra.mxu0 %v2177
        %v2283 = vpop.f32.mrf.mxu0
        %v2284 = vadd.f32 0.0, %v2283
        %2285 = vmatmul.f32.gmra.mxu0 %v2178
        %v2286 = vpop.f32.mrf.mxu0
        %v2287 = vadd.f32 0.0, %v2286
        %2288 = vmatmul.f32.gmra.mxu0 %v2179
        %v2289 = vpop.f32.mrf.mxu0
        %v2290 = vadd.f32 0.0, %v2289
        %2291 = vmatmul.f32.gmra.mxu0 %v2180
        %v2292 = vpop.f32.mrf.mxu0
        %v2293 = vadd.f32 0.0, %v2292
        %2294 = vmatmul.f32.gmra.mxu0 %v2181
        %v2295 = vpop.f32.mrf.mxu0
        %v2296 = vadd.f32 0.0, %v2295
        %2297 = vmatmul.f32.gmra.mxu0 %v2182
        %v2298 = vpop.f32.mrf.mxu0
        %v2299 = vadd.f32 0.0, %v2298
        %2300 = vmatmul.f32.gmra.mxu0 %v2183
        %v2301 = vpop.f32.mrf.mxu0
        %v2302 = vadd.f32 0.0, %v2301
        %2303 = vmatmul.f32.gmra.mxu0 %v2184
        %v2304 = vpop.f32.mrf.mxu0
        %v2305 = vadd.f32 0.0, %v2304
        %2306 = vmatmul.f32.gmra.mxu0 %v2185
        %v2307 = vpop.f32.mrf.mxu0
        %v2308 = vadd.f32 0.0, %v2307
        %2309 = vmatmul.f32.gmra.mxu0 %v2186
        %v2310 = vpop.f32.mrf.mxu0
        %v2311 = vadd.f32 0.0, %v2310
        %2312 = vmatmul.f32.gmra.mxu0 %v2187
        %v2313 = vpop.f32.mrf.mxu0
        %v2314 = vadd.f32 0.0, %v2313
        %2315 = vmatmul.f32.gmra.mxu0 %v2188
        %v2316 = vpop.f32.mrf.mxu0
        %v2317 = vadd.f32 0.0, %v2316
        %2318 = vdwg.mxu0
        %v2319 = vadd.f32 %v2125, %v2224
        %v2320 = vadd.f32 %v2126, %v2227
        %v2321 = vadd.f32 %v2127, %v2230
        %v2322 = vadd.f32 %v2128, %v2233
        %v2323 = vadd.f32 %v2129, %v2236
        %v2324 = vadd.f32 %v2130, %v2239
        %v2325 = vadd.f32 %v2131, %v2242
        %v2326 = vadd.f32 %v2132, %v2245
        %v2327 = vadd.f32 %v2133, %v2248
        %v2328 = vadd.f32 %v2134, %v2251
        %v2329 = vadd.f32 %v2135, %v2254
        %v2330 = vadd.f32 %v2136, %v2257
        %v2331 = vadd.f32 %v2137, %v2260
        %v2332 = vadd.f32 %v2138, %v2263
        %v2333 = vadd.f32 %v2139, %v2266
        %v2334 = vadd.f32 %v2140, %v2269
        %v2335 = vadd.f32 %v2141, %v2272
        %v2336 = vadd.f32 %v2142, %v2275
        %v2337 = vadd.f32 %v2143, %v2278
        %v2338 = vadd.f32 %v2144, %v2281
        %v2339 = vadd.f32 %v2145, %v2284
        %v2340 = vadd.f32 %v2146, %v2287
        %v2341 = vadd.f32 %v2147, %v2290
        %v2342 = vadd.f32 %v2148, %v2293
        %v2343 = vadd.f32 %v2149, %v2296
        %v2344 = vadd.f32 %v2150, %v2299
        %v2345 = vadd.f32 %v2151, %v2302
        %v2346 = vadd.f32 %v2152, %v2305
        %v2347 = vadd.f32 %v2153, %v2308
        %v2348 = vadd.f32 %v2154, %v2311
        %v2349 = vadd.f32 %v2155, %v2314
        %v2350 = vadd.f32 %v2156, %v2317
        %v2351 = vld [vmem:[%s5] sm:$0x1]
        %v2353 = vperm.slane %v2351, 0
        %v2355 = vmul.f32 %v2319, %v2353
        %v2356 = vmul.f32 %v2320, %v2353
        %v2357 = vmul.f32 %v2321, %v2353
        %v2358 = vmul.f32 %v2322, %v2353
        %v2359 = vmul.f32 %v2323, %v2353
        %v2360 = vmul.f32 %v2324, %v2353
        %v2361 = vmul.f32 %v2325, %v2353
        %v2362 = vmul.f32 %v2326, %v2353
        %v2363 = vmul.f32 %v2327, %v2353
        %v2364 = vmul.f32 %v2328, %v2353
        %v2365 = vmul.f32 %v2329, %v2353
        %v2366 = vmul.f32 %v2330, %v2353
        %v2367 = vmul.f32 %v2331, %v2353
        %v2368 = vmul.f32 %v2332, %v2353
        %v2369 = vmul.f32 %v2333, %v2353
        %v2370 = vmul.f32 %v2334, %v2353
        %v2371 = vmul.f32 %v2335, %v2353
        %v2372 = vmul.f32 %v2336, %v2353
        %v2373 = vmul.f32 %v2337, %v2353
        %v2374 = vmul.f32 %v2338, %v2353
        %v2375 = vmul.f32 %v2339, %v2353
        %v2376 = vmul.f32 %v2340, %v2353
        %v2377 = vmul.f32 %v2341, %v2353
        %v2378 = vmul.f32 %v2342, %v2353
        %v2379 = vmul.f32 %v2343, %v2353
        %v2380 = vmul.f32 %v2344, %v2353
        %v2381 = vmul.f32 %v2345, %v2353
        %v2382 = vmul.f32 %v2346, %v2353
        %v2383 = vmul.f32 %v2347, %v2353
        %v2384 = vmul.f32 %v2348, %v2353
        %v2385 = vmul.f32 %v2349, %v2353
        %v2386 = vmul.f32 %v2350, %v2353
        %v2387 = vld [vmem:[%s6] sm:$0x1]
        %v2389 = vperm.slane %v2387, 0
        %v2391 = vadd.f32 %v2355, %v2389
        %v2392 = vadd.f32 %v2356, %v2389
        %v2393 = vadd.f32 %v2357, %v2389
        %v2394 = vadd.f32 %v2358, %v2389
        %v2395 = vadd.f32 %v2359, %v2389
        %v2396 = vadd.f32 %v2360, %v2389
        %v2397 = vadd.f32 %v2361, %v2389
        %v2398 = vadd.f32 %v2362, %v2389
        %v2399 = vadd.f32 %v2363, %v2389
        %v2400 = vadd.f32 %v2364, %v2389
        %v2401 = vadd.f32 %v2365, %v2389
        %v2402 = vadd.f32 %v2366, %v2389
        %v2403 = vadd.f32 %v2367, %v2389
        %v2404 = vadd.f32 %v2368, %v2389
        %v2405 = vadd.f32 %v2369, %v2389
        %v2406 = vadd.f32 %v2370, %v2389
        %v2407 = vadd.f32 %v2371, %v2389
        %v2408 = vadd.f32 %v2372, %v2389
        %v2409 = vadd.f32 %v2373, %v2389
        %v2410 = vadd.f32 %v2374, %v2389
        %v2411 = vadd.f32 %v2375, %v2389
        %v2412 = vadd.f32 %v2376, %v2389
        %v2413 = vadd.f32 %v2377, %v2389
        %v2414 = vadd.f32 %v2378, %v2389
        %v2415 = vadd.f32 %v2379, %v2389
        %v2416 = vadd.f32 %v2380, %v2389
        %v2417 = vadd.f32 %v2381, %v2389
        %v2418 = vadd.f32 %v2382, %v2389
        %v2419 = vadd.f32 %v2383, %v2389
        %v2420 = vadd.f32 %v2384, %v2389
        %v2421 = vadd.f32 %v2385, %v2389
        %v2422 = vadd.f32 %v2386, %v2389
        %v2423 = vmax.f32 %v2391, 0.0
        %v2424 = vmax.f32 %v2392, 0.0
        %v2425 = vmax.f32 %v2393, 0.0
        %v2426 = vmax.f32 %v2394, 0.0
        %v2427 = vmax.f32 %v2395, 0.0
        %v2428 = vmax.f32 %v2396, 0.0
        %v2429 = vmax.f32 %v2397, 0.0
        %v2430 = vmax.f32 %v2398, 0.0
        %v2431 = vmax.f32 %v2399, 0.0
        %v2432 = vmax.f32 %v2400, 0.0
        %v2433 = vmax.f32 %v2401, 0.0
        %v2434 = vmax.f32 %v2402, 0.0
        %v2435 = vmax.f32 %v2403, 0.0
        %v2436 = vmax.f32 %v2404, 0.0
        %v2437 = vmax.f32 %v2405, 0.0
        %v2438 = vmax.f32 %v2406, 0.0
        %v2439 = vmax.f32 %v2407, 0.0
        %v2440 = vmax.f32 %v2408, 0.0
        %v2441 = vmax.f32 %v2409, 0.0
        %v2442 = vmax.f32 %v2410, 0.0
        %v2443 = vmax.f32 %v2411, 0.0
        %v2444 = vmax.f32 %v2412, 0.0
        %v2445 = vmax.f32 %v2413, 0.0
        %v2446 = vmax.f32 %v2414, 0.0
        %v2447 = vmax.f32 %v2415, 0.0
        %v2448 = vmax.f32 %v2416, 0.0
        %v2449 = vmax.f32 %v2417, 0.0
        %v2450 = vmax.f32 %v2418, 0.0
        %v2451 = vmax.f32 %v2419, 0.0
        %v2452 = vmax.f32 %v2420, 0.0
        %v2453 = vmax.f32 %v2421, 0.0
        %v2454 = vmax.f32 %v2422, 0.0
        %v2455 = vadd.f32 %v372, %v2423
        %v2456 = vadd.f32 %v373, %v2424
        %v2457 = vadd.f32 %v374, %v2425
        %v2458 = vadd.f32 %v375, %v2426
        %v2459 = vadd.f32 %v376, %v2427
        %v2460 = vadd.f32 %v377, %v2428
        %v2461 = vadd.f32 %v378, %v2429
        %v2462 = vadd.f32 %v379, %v2430
        %v2463 = vadd.f32 %v380, %v2431
        %v2464 = vadd.f32 %v381, %v2432
        %v2465 = vadd.f32 %v382, %v2433
        %v2466 = vadd.f32 %v383, %v2434
        %v2467 = vadd.f32 %v384, %v2435
        %v2468 = vadd.f32 %v385, %v2436
        %v2469 = vadd.f32 %v386, %v2437
        %v2470 = vadd.f32 %v387, %v2438
        %v2471 = vadd.f32 %v388, %v2439
        %v2472 = vadd.f32 %v389, %v2440
        %v2473 = vadd.f32 %v390, %v2441
        %v2474 = vadd.f32 %v391, %v2442
        %v2475 = vadd.f32 %v392, %v2443
        %v2476 = vadd.f32 %v393, %v2444
        %v2477 = vadd.f32 %v394, %v2445
        %v2478 = vadd.f32 %v395, %v2446
        %v2479 = vadd.f32 %v396, %v2447
        %v2480 = vadd.f32 %v397, %v2448
        %v2481 = vadd.f32 %v398, %v2449
        %v2482 = vadd.f32 %v399, %v2450
        %v2483 = vadd.f32 %v400, %v2451
        %v2484 = vadd.f32 %v401, %v2452
        %v2485 = vadd.f32 %v402, %v2453
        %v2486 = vadd.f32 %v403, %v2454
        %2487 = vst [vmem:[%s331] sm:$0xff] %v2455
        %2488 = vst [vmem:[%s331 + $0x8] sm:$0xff] %v2456
        %2489 = vst [vmem:[%s331 + $0x10] sm:$0xff] %v2457
        %2490 = vst [vmem:[%s331 + $0x18] sm:$0xff] %v2458
        %2491 = vst [vmem:[%s331 + $0x20] sm:$0xff] %v2459
        %2492 = vst [vmem:[%s331 + $0x28] sm:$0xff] %v2460
        %2493 = vst [vmem:[%s331 + $0x30] sm:$0xff] %v2461
        %2494 = vst [vmem:[%s331 + $0x38] sm:$0xff] %v2462
        %2495 = vst [vmem:[%s331 + $0x40] sm:$0xff] %v2463
        %2496 = vst [vmem:[%s331 + $0x48] sm:$0xff] %v2464
        %2497 = vst [vmem:[%s331 + $0x50] sm:$0xff] %v2465
        %2498 = vst [vmem:[%s331 + $0x58] sm:$0xff] %v2466
        %2499 = vst [vmem:[%s331 + $0x60] sm:$0xff] %v2467
        %2500 = vst [vmem:[%s331 + $0x68] sm:$0xff] %v2468
        %2501 = vst [vmem:[%s331 + $0x70] sm:$0xff] %v2469
        %2502 = vst [vmem:[%s331 + $0x78] sm:$0xff] %v2470
        %2503 = vst [vmem:[%s331 + $0x80] sm:$0xff] %v2471
        %2504 = vst [vmem:[%s331 + $0x88] sm:$0xff] %v2472
        %2505 = vst [vmem:[%s331 + $0x90] sm:$0xff] %v2473
        %2506 = vst [vmem:[%s331 + $0x98] sm:$0xff] %v2474
        %2507 = vst [vmem:[%s331 + $0xa0] sm:$0xff] %v2475
        %2508 = vst [vmem:[%s331 + $0xa8] sm:$0xff] %v2476
        %2509 = vst [vmem:[%s331 + $0xb0] sm:$0xff] %v2477
        %2510 = vst [vmem:[%s331 + $0xb8] sm:$0xff] %v2478
        %2511 = vst [vmem:[%s331 + $0xc0] sm:$0xff] %v2479
        %2512 = vst [vmem:[%s331 + $0xc8] sm:$0xff] %v2480
        %2513 = vst [vmem:[%s331 + $0xd0] sm:$0xff] %v2481
        %2514 = vst [vmem:[%s331 + $0xd8] sm:$0xff] %v2482
        %2515 = vst [vmem:[%s331 + $0xe0] sm:$0xff] %v2483
        %2516 = vst [vmem:[%s331 + $0xe8] sm:$0xff] %v2484
        %2517 = vst [vmem:[%s331 + $0xf0] sm:$0xff] %v2485
        %2518 = vst [vmem:[%s331 + $0xf8] sm:$0xff] %v2486
        %s2519 = sand.u32 %s185, 1
        %s2520 = scalar_lea.sflag [#allocation5], %s2519
        %s2521 = sand.u32 %s185, 1
        %s2522 = smul.addr %s2521, 256
        %s2523 = scalar_lea.vmem [#allocation9], %s2522
        // Predicated region
        $region61: #{tpu_custom_call.1} parent=47 // pred_check
          %p2524 = pneg %p195
        $region62: #{tpu_custom_call.1} parent=47 // pred_check_branch
          %2526 = sbr.rel (%p2524) target = $region64
        $region63: #{tpu_custom_call.1} parent=47 // pred_region
          %2528 = vsyncadd %s2520, 0
          %s2529 = smul.addr %s25, 32
          %s2530 = smul.addr %s2529, 8
          %s2531 = scalar_lea.hbm %s7, %s2530
          %s2532 = sshll.u32 %s2523, 4
          %s2533 = int_to_ptr.vmem [resolvable:$true] %s2532
          %s2534 = sshll.u32 %s2531, 4
          %s2535 = int_to_ptr.hbm [resolvable:$true] %s2534
          %2540 = dma.vmem_to_hbm [thread:$0]  %s2533, 4096, %s2535, %s2520, 128, 128, 8
        $region64: #{tpu_custom_call.1} parent=47 // pred_fallthru
          _
      $region48: #{tpu_custom_call.1} parent=5 // pred_fallthru
        _
      %p2541 = scmp.le.s32.totalorder 2, %s20
      // Predicated region
      $region65: #{tpu_custom_call.1} parent=5 // pred_check
        %p2542 = pneg %p2541
      $region66: #{tpu_custom_call.1} parent=5 // pred_check_branch
        %2544 = sbr.rel (%p2542) target = $region68
      $region67: #{tpu_custom_call.1} parent=5 // pred_region
        %s2545 = ssub.s32 %s20, 2
        // Predicated region
        $region69: #{tpu_custom_call.1} parent=67 // pred_check
          %p2546 = pneg %p201
        $region70: #{tpu_custom_call.1} parent=67 // pred_check_branch
          %2548 = sbr.rel (%p2546) target = $region72
        $region71: #{tpu_custom_call.1} parent=67 // pred_region
          %s2549 = sand.u32 %s186, 1
          %s2550 = scalar_lea.sflag [#allocation5], %s2549
          %s2551 = sand.u32 %s186, 1
          %s2552 = smul.addr %s2551, 256
          %s2553 = scalar_lea.vmem [#allocation9], %s2552
          %2555 = dma.done %s2550, 4096
        $region72: #{tpu_custom_call.1} parent=67 // pred_fallthru
          _
      $region68: #{tpu_custom_call.1} parent=5 // pred_fallthru
        _
    $region6: #{tpu_custom_call.1} parent=1 // loop_footer
      %s24 = sadd.s32 1, %s20
    $region7: #{tpu_custom_call.1} parent=1 // loop_footer_branch
      %19 = sbr.rel target = $region3
    $region8: #{tpu_custom_call.1} parent=1 // loop_exit
      _
    %2556 = vsyncpa [#allocation4], 1
    %s2557 = scalar_lea.sflag [#allocation4], 1
    %2558 = vsyncpa %s2557, 1
    %2559 = vsyncpa [#allocation7], 1
    %2560 = vsyncpa [#allocation5], 1
    %s2561 = scalar_lea.sflag [#allocation5], 1
    %2562 = vsyncpa %s2561, 1

</llo_original>
